<compile_context>
chip_gen: v7x
topology: tpu7x:2x2x1
jax: 0.10.0
libtpu: 0.0.40
codegen_flags: <defaults>
</compile_context>

<pallas_src>
import functools

import jax
import jax.numpy as jnp
from jax import lax
from jax.experimental import pallas as pl
from jax.experimental.pallas import tpu as pltpu


# ----------------------------------------------------------------------------
# Stacked linear: out[m] = x @ w[m] + b[m]  (m = matrix index, e.g. Q/K/V).
# Grid = (matrices, col_tiles, row_tiles); row axis innermost so the weight
# column-block stays resident across the activation stream.
# ----------------------------------------------------------------------------
def _linear_kernel(x_ref, w_ref, b_ref, o_ref):
    acc = jnp.dot(x_ref[...], w_ref[0], preferred_element_type=jnp.float32)
    o_ref[0] = (acc + b_ref[0]).astype(o_ref.dtype)


def _linear_stacked(x, w3, b3, *, out_dtype, row_tile, col_tile):
    """x: (R, Din). w3: (M, Din, Dout). b3: (M, 1, Dout) f32. -> (M, R, Dout)."""
    R, Din = x.shape
    M, _, Dout = w3.shape
    tm = min(row_tile, R)
    tn = min(col_tile, Dout)
    grid = (M, pl.cdiv(Dout, tn), pl.cdiv(R, tm))

    return pl.pallas_call(
        _linear_kernel,
        out_shape=jax.ShapeDtypeStruct((M, R, Dout), out_dtype),
        grid_spec=pltpu.PrefetchScalarGridSpec(
            num_scalar_prefetch=0,
            grid=grid,
            in_specs=[
                pl.BlockSpec((tm, Din), lambda m, j, i: (i, 0)),
                pl.BlockSpec((1, Din, tn), lambda m, j, i: (m, 0, j)),
                pl.BlockSpec((1, 1, tn), lambda m, j, i: (m, 0, j)),
            ],
            out_specs=pl.BlockSpec((1, tm, tn), lambda m, j, i: (m, i, j)),
        ),
        compiler_params=pltpu.CompilerParams(
            dimension_semantics=("parallel", "parallel", "parallel")),
    )(x, w3, b3)


# ----------------------------------------------------------------------------
# Attention core.  One grid step = (batch, q-tile); all heads handled with a
# static in-kernel loop over static lane slices of the (tq, D) / (N, D) slabs.
# Q is pre-scaled (scale folded into Wq / bq).
# ----------------------------------------------------------------------------
def _attn_kernel(q_ref, k_ref, v_ref, o_ref, *, heads, hd):
    # NOTE: static unroll over heads; per-head temporaries ((tq, N) scores)
    # are dead after each iteration, so live ranges stay bounded.
    for h in range(heads):
        sl = slice(h * hd, (h + 1) * hd)
        qh = q_ref[0, 0, :, sl]                      # (tq, hd)
        kh = k_ref[0, 0, :, sl]                      # (N, hd)
        vh = v_ref[0, 0, :, sl]                      # (N, hd)

        # scores = q @ k^T without an explicit transpose (contract last dims).
        s = lax.dot_general(qh, kh, (((1,), (1,)), ((), ())),
                            preferred_element_type=jnp.float32)   # (tq, N) f32
        s = s - jnp.max(s, axis=-1, keepdims=True)                # f32 row max
        # exp in the compute dtype (bf16 on v6e/v7x halves EUP time);
        # denominator accumulated in f32.
        p = jnp.exp(s.astype(qh.dtype))
        denom = jnp.sum(p.astype(jnp.float32), axis=-1, keepdims=True)

        # PV matmul first, then scale by the (approx, EUP) reciprocal:
        # tq*hd multiplies instead of tq*N, and no serial dep before the MXU.
        pv = jnp.dot(p.astype(vh.dtype), vh,
                     preferred_element_type=jnp.float32)          # (tq, hd) f32
        o = pv * pl.reciprocal(denom, approx=True)
        o_ref[0, :, sl] = o.astype(o_ref.dtype)


def _attention(qkv, *, heads, q_tile, out_dtype):
    """qkv: (3, B, N, D) with Q pre-scaled. Returns (B, N, D) head-concat output."""
    _, B, N, D = qkv.shape
    hd = D // heads
    tq = min(q_tile, N)
    grid = (B, pl.cdiv(N, tq))

    q_spec = pl.BlockSpec((1, 1, tq, D), lambda b, i: (0, b, i, 0))
    k_spec = pl.BlockSpec((1, 1, N, D), lambda b, i: (1, b, 0, 0))
    v_spec = pl.BlockSpec((1, 1, N, D), lambda b, i: (2, b, 0, 0))
    o_spec = pl.BlockSpec((1, tq, D), lambda b, i: (b, i, 0))

    kernel = functools.partial(_attn_kernel, heads=heads, hd=hd)
    return pl.pallas_call(
        kernel,
        out_shape=jax.ShapeDtypeStruct((B, N, D), out_dtype),
        grid_spec=pltpu.PrefetchScalarGridSpec(
            num_scalar_prefetch=0,
            grid=grid,
            in_specs=[q_spec, k_spec, v_spec],
            out_specs=o_spec,
        ),
        compiler_params=pltpu.CompilerParams(
            dimension_semantics=("parallel", "parallel")),
    )(qkv, qkv, qkv)


# ----------------------------------------------------------------------------
# Full MHA forward.
# ----------------------------------------------------------------------------
@functools.partial(
    jax.jit,
    static_argnames=("heads", "compute_dtype", "row_tile", "col_tile", "q_tile"))
def mha_forward(x, params, heads, *, compute_dtype=jnp.float32,
                row_tile=256, col_tile=512, q_tile=256):
    """x: (B, N, D). params: (D, D) weights (input-major) and (1, D) biases.

    compute_dtype: MXU operand / exp dtype (jnp.bfloat16 recommended on TPU).
    row_tile / q_tile: 256 is MXU-friendly on v6e/v7x (128 suffices on v5e).
    col_tile: output-column tile of the projections (bounds resident weight).
    Softmax max/denominator and all matmul accumulation stay in f32.
    """
    B, N, D = x.shape
    assert D % heads == 0, "heads must divide dim"
    hd = D // heads
    scale = hd ** (-0.5)

    # Fold the attention scale into the Q projection (zero in-kernel cost).
    # NOTE: folding happens before the compute_dtype cast (tiny bf16 rounding
    # difference vs. scaling after projection).
    w3 = jnp.stack([params["wq"] * scale, params["wk"], params["wv"]])
    b3 = jnp.stack([params["bq"] * scale, params["bk"], params["bv"]])
    w3 = w3.astype(compute_dtype)
    b3 = b3.astype(jnp.float32)          # biases add into the f32 accumulator
    wo = params["wo"].astype(compute_dtype)[None]        # (1, D, D)
    bo = params["bo"].astype(jnp.float32)[None]          # (1, 1, D)

    # (1) Stacked Q/K/V projection over row/column tiles of (B*N, D) x (D, D).
    x_rows = x.reshape(B * N, D).astype(compute_dtype)
    qkv = _linear_stacked(x_rows, w3, b3, out_dtype=compute_dtype,
                          row_tile=row_tile, col_tile=col_tile)   # (3, B*N, D)
    qkv = qkv.reshape(3, B, N, D)                                 # free reshape

    # (2) Attention core, gridded over (batch, q-tile); writes (B, N, D)
    #     head-concatenated output directly (no wrapper transposes).
    attn_out = _attention(qkv, heads=heads, q_tile=q_tile,
                          out_dtype=compute_dtype)                # (B, N, D)

    # (3) Single K=D output projection.
    out = _linear_stacked(attn_out.reshape(B * N, D), wo, bo,
                          out_dtype=x.dtype, row_tile=row_tile,
                          col_tile=col_tile)                      # (1, B*N, D)
    return out[0].reshape(B, N, D)


# ----------------------------------------------------------------------------
# Parameters & pure-JAX reference.
# ----------------------------------------------------------------------------
def init_params(key, dim):
    """nn.Linear-like init. Weights stored as (D_in, D_out) (pre-transposed
    w.r.t. PyTorch's (out, in) convention)."""
    bound = 1.0 / (dim ** 0.5)
    keys = jax.random.split(key, 8)

    def u(k, shape):
        return jax.random.uniform(k, shape, jnp.float32, -bound, bound)

    return {
        "wq": u(keys[0], (dim, dim)), "bq": u(keys[1], (1, dim)),
        "wk": u(keys[2], (dim, dim)), "bk": u(keys[3], (1, dim)),
        "wv": u(keys[4], (dim, dim)), "bv": u(keys[5], (1, dim)),
        "wo": u(keys[6], (dim, dim)), "bo": u(keys[7], (1, dim)),
    }


def mha_reference(x, params, heads):
    """Pure-JAX f32 reference matching the PyTorch forward (eval dropout)."""
    B, N, D = x.shape
    hd = D // heads
    scale = hd ** (-0.5)
    q = x @ params["wq"] + params["bq"][0]
    k = x @ params["wk"] + params["bk"][0]
    v = x @ params["wv"] + params["bv"][0]

    def split(t):  # (B, N, D) -> (B, H, N, hd)
        return t.reshape(B, N, heads, hd).transpose(0, 2, 1, 3)

    q, k, v = split(q), split(k), split(v)
    attn = jax.nn.softmax(jnp.einsum("bhnd,bhmd->bhnm", q, k) * scale, axis=-1)
    out = jnp.einsum("bhnm,bhmd->bhnd", attn, v)
    out = out.transpose(0, 2, 1, 3).reshape(B, N, D)
    return out @ params["wo"] + params["bo"][0]


if __name__ == "__main__":
    B, N, D, HEADS = 2, 8, 32, 4

    key = jax.random.PRNGKey(0)
    kx, kp = jax.random.split(key)
    x = jax.random.normal(kx, (B, N, D), jnp.float32)
    params = init_params(kp, D)

    ref = mha_reference(x, params, HEADS)

    # f32 operand path (matches PyTorch f32 semantics up to approx reciprocal).
    out = jax.block_until_ready(mha_forward(x, params, HEADS))
    assert out.shape == (B, N, D)
    err = float(jnp.max(jnp.abs(out - ref)))
    assert err < 1e-2, err

    # bf16 MXU-operand / bf16-exp path (recommended on v5e/v6e/v7x),
    # f32 accumulation, f32 softmax max/denominator.
    out_bf16 = jax.block_until_ready(
        mha_forward(x, params, HEADS, compute_dtype=jnp.bfloat16))
    err_bf16 = float(jnp.max(jnp.abs(out_bf16 - ref)))
    assert err_bf16 < 1e-1, err_bf16

    print("KERNEL_OK")
</pallas_src>

<mosaic_0001>
module attributes {stable_mosaic.version = 11 : i64} {
  func.func @_linear_kernel(%arg0: i32, %arg1: i32, %arg2: i32, %arg3: memref<16x32xf32, #tpu.memory_space<vmem>>, %arg4: memref<1x32x32xf32, #tpu.memory_space<vmem>>, %arg5: memref<1x1x32xf32, #tpu.memory_space<vmem>>, %arg6: memref<1x16x32xf32, #tpu.memory_space<vmem>>) attributes {dimension_semantics = [#tpu.dimension_semantics<parallel>, #tpu.dimension_semantics<parallel>, #tpu.dimension_semantics<parallel>], iteration_bounds = array<i64: 1, 1, 1>, scalar_prefetch = 0 : i64, scratch_operands = 0 : i64, tpu.core_type = #tpu.core_type<tc>, window_params = [{transform_indices = @transform_0, window_bounds = array<i64: 16, 32>}, {transform_indices = @transform_1, window_bounds = array<i64: 1, 32, 32>}, {transform_indices = @transform_2, window_bounds = array<i64: 1, 1, 32>}, {transform_indices = @transform_3, window_bounds = array<i64: 1, 16, 32>}]} {
    %c0 = arith.constant 0 : index
    %c0_0 = arith.constant 0 : index
    %0 = vector.load %arg3[%c0, %c0_0] : memref<16x32xf32, #tpu.memory_space<vmem>>, vector<16x32xf32>
    %c0_1 = arith.constant 0 : index
    %c0_2 = arith.constant 0 : index
    %c0_3 = arith.constant 0 : index
    %1 = vector.load %arg4[%c0_1, %c0_2, %c0_3] : memref<1x32x32xf32, #tpu.memory_space<vmem>>, vector<1x32x32xf32>
    %2 = vector.shape_cast %1 : vector<1x32x32xf32> to vector<32x32xf32>
    %cst = arith.constant dense<0.000000e+00> : vector<16x32xf32>
    %3 = tpu.matmul %0, %2, %cst {dimension_numbers = #tpu.dot_dimension_numbers<[1], [0], [0], [1], [0, 0, 1, 1], [], []>} : vector<16x32xf32>, vector<32x32xf32>, vector<16x32xf32> -> vector<16x32xf32>
    %c0_4 = arith.constant 0 : index
    %c0_5 = arith.constant 0 : index
    %c0_6 = arith.constant 0 : index
    %4 = vector.load %arg5[%c0_4, %c0_5, %c0_6] : memref<1x1x32xf32, #tpu.memory_space<vmem>>, vector<1x1x32xf32>
    %5 = vector.shape_cast %4 : vector<1x1x32xf32> to vector<1x32xf32>
    %6 = vector.broadcast %5 : vector<1x32xf32> to vector<16x32xf32>
    %7 = arith.addf %3, %6 : vector<16x32xf32>
    %c0_7 = arith.constant 0 : index
    %c0_8 = arith.constant 0 : index
    %c0_9 = arith.constant 0 : index
    %8 = vector.load %arg6[%c0_7, %c0_8, %c0_9] : memref<1x16x32xf32, #tpu.memory_space<vmem>>, vector<1x16x32xf32>
    %9 = vector.shape_cast %8 : vector<1x16x32xf32> to vector<16x32xf32>
    %10 = vector.shape_cast %7 : vector<16x32xf32> to vector<1x16x32xf32>
    tpu.vector_store %arg6[%c0_7, %c0_8, %c0_9], %10 {strides = array<i32>} : memref<1x16x32xf32, #tpu.memory_space<vmem>>, vector<1x16x32xf32>,
    return
  }
  func.func @transform_0(%arg0: i32, %arg1: i32, %arg2: i32) -> (i32, i32) {
    %c0_i32 = arith.constant 0 : i32
    %c0_i32_0 = arith.constant 0 : i32
    return %arg2, %c0_i32 : i32, i32
  }
  func.func @transform_1(%arg0: i32, %arg1: i32, %arg2: i32) -> (i32, i32, i32) {
    %c0_i32 = arith.constant 0 : i32
    %c0_i32_0 = arith.constant 0 : i32
    return %arg0, %c0_i32, %arg1 : i32, i32, i32
  }
  func.func @transform_2(%arg0: i32, %arg1: i32, %arg2: i32) -> (i32, i32, i32) {
    %c0_i32 = arith.constant 0 : i32
    %c0_i32_0 = arith.constant 0 : i32
    return %arg0, %c0_i32, %arg1 : i32, i32, i32
  }
  func.func @transform_3(%arg0: i32, %arg1: i32, %arg2: i32) -> (i32, i32, i32) {
    %c0_i32 = arith.constant 0 : i32
    return %arg0, %arg2, %arg1 : i32, i32, i32
  }
}

module attributes {stable_mosaic.version = 11 : i64} {
  func.func @_linear_kernel(%arg0: i32, %arg1: i32, %arg2: i32, %arg3: memref<16x32xf32, #tpu.memory_space<vmem>>, %arg4: memref<1x32x32xf32, #tpu.memory_space<vmem>>, %arg5: memref<1x1x32xf32, #tpu.memory_space<vmem>>, %arg6: memref<1x16x32xf32, #tpu.memory_space<vmem>>) attributes {dimension_semantics = [#tpu.dimension_semantics<parallel>, #tpu.dimension_semantics<parallel>, #tpu.dimension_semantics<parallel>], iteration_bounds = array<i64: 3, 1, 1>, scalar_prefetch = 0 : i64, scratch_operands = 0 : i64, tpu.core_type = #tpu.core_type<tc>, window_params = [{transform_indices = @transform_0, window_bounds = array<i64: 16, 32>}, {transform_indices = @transform_1, window_bounds = array<i64: 1, 32, 32>}, {transform_indices = @transform_2, window_bounds = array<i64: 1, 1, 32>}, {transform_indices = @transform_3, window_bounds = array<i64: 1, 16, 32>}]} {
    %c0 = arith.constant 0 : index
    %c0_0 = arith.constant 0 : index
    %0 = vector.load %arg3[%c0, %c0_0] : memref<16x32xf32, #tpu.memory_space<vmem>>, vector<16x32xf32>
    %c0_1 = arith.constant 0 : index
    %c0_2 = arith.constant 0 : index
    %c0_3 = arith.constant 0 : index
    %1 = vector.load %arg4[%c0_1, %c0_2, %c0_3] : memref<1x32x32xf32, #tpu.memory_space<vmem>>, vector<1x32x32xf32>
    %2 = vector.shape_cast %1 : vector<1x32x32xf32> to vector<32x32xf32>
    %cst = arith.constant dense<0.000000e+00> : vector<16x32xf32>
    %3 = tpu.matmul %0, %2, %cst {dimension_numbers = #tpu.dot_dimension_numbers<[1], [0], [0], [1], [0, 0, 1, 1], [], []>} : vector<16x32xf32>, vector<32x32xf32>, vector<16x32xf32> -> vector<16x32xf32>
    %c0_4 = arith.constant 0 : index
    %c0_5 = arith.constant 0 : index
    %c0_6 = arith.constant 0 : index
    %4 = vector.load %arg5[%c0_4, %c0_5, %c0_6] : memref<1x1x32xf32, #tpu.memory_space<vmem>>, vector<1x1x32xf32>
    %5 = vector.shape_cast %4 : vector<1x1x32xf32> to vector<1x32xf32>
    %6 = vector.broadcast %5 : vector<1x32xf32> to vector<16x32xf32>
    %7 = arith.addf %3, %6 : vector<16x32xf32>
    %c0_7 = arith.constant 0 : index
    %c0_8 = arith.constant 0 : index
    %c0_9 = arith.constant 0 : index
    %8 = vector.load %arg6[%c0_7, %c0_8, %c0_9] : memref<1x16x32xf32, #tpu.memory_space<vmem>>, vector<1x16x32xf32>
    %9 = vector.shape_cast %8 : vector<1x16x32xf32> to vector<16x32xf32>
    %10 = vector.shape_cast %7 : vector<16x32xf32> to vector<1x16x32xf32>
    tpu.vector_store %arg6[%c0_7, %c0_8, %c0_9], %10 {strides = array<i32>} : memref<1x16x32xf32, #tpu.memory_space<vmem>>, vector<1x16x32xf32>,
    return
  }
  func.func @transform_0(%arg0: i32, %arg1: i32, %arg2: i32) -> (i32, i32) {
    %c0_i32 = arith.constant 0 : i32
    %c0_i32_0 = arith.constant 0 : i32
    return %arg2, %c0_i32 : i32, i32
  }
  func.func @transform_1(%arg0: i32, %arg1: i32, %arg2: i32) -> (i32, i32, i32) {
    %c0_i32 = arith.constant 0 : i32
    %c0_i32_0 = arith.constant 0 : i32
    return %arg0, %c0_i32, %arg1 : i32, i32, i32
  }
  func.func @transform_2(%arg0: i32, %arg1: i32, %arg2: i32) -> (i32, i32, i32) {
    %c0_i32 = arith.constant 0 : i32
    %c0_i32_0 = arith.constant 0 : i32
    return %arg0, %c0_i32, %arg1 : i32, i32, i32
  }
  func.func @transform_3(%arg0: i32, %arg1: i32, %arg2: i32) -> (i32, i32, i32) {
    %c0_i32 = arith.constant 0 : i32
    return %arg0, %arg2, %arg1 : i32, i32, i32
  }
}

module attributes {stable_mosaic.version = 11 : i64} {
  func.func @_attn_kernel(%arg0: i32, %arg1: i32, %arg2: memref<1x1x8x32xf32, #tpu.memory_space<vmem>>, %arg3: memref<1x1x8x32xf32, #tpu.memory_space<vmem>>, %arg4: memref<1x1x8x32xf32, #tpu.memory_space<vmem>>, %arg5: memref<1x8x32xf32, #tpu.memory_space<vmem>>) attributes {dimension_semantics = [#tpu.dimension_semantics<parallel>, #tpu.dimension_semantics<parallel>], iteration_bounds = array<i64: 2, 1>, scalar_prefetch = 0 : i64, scratch_operands = 0 : i64, tpu.core_type = #tpu.core_type<tc>, window_params = [{transform_indices = @transform_0, window_bounds = array<i64: 1, 1, 8, 32>}, {transform_indices = @transform_1, window_bounds = array<i64: 1, 1, 8, 32>}, {transform_indices = @transform_2, window_bounds = array<i64: 1, 1, 8, 32>}, {transform_indices = @transform_3, window_bounds = array<i64: 1, 8, 32>}]} {
    %c0 = arith.constant 0 : index
    %c0_0 = arith.constant 0 : index
    %c0_1 = arith.constant 0 : index
    %c0_2 = arith.constant 0 : index
    %0 = vector.load %arg2[%c0, %c0_0, %c0_1, %c0_2] : memref<1x1x8x32xf32, #tpu.memory_space<vmem>>, vector<1x1x8x8xf32>
    %1 = vector.shape_cast %0 : vector<1x1x8x8xf32> to vector<8x8xf32>
    %c0_3 = arith.constant 0 : index
    %c0_4 = arith.constant 0 : index
    %c0_5 = arith.constant 0 : index
    %c0_6 = arith.constant 0 : index
    %2 = vector.load %arg3[%c0_3, %c0_4, %c0_5, %c0_6] : memref<1x1x8x32xf32, #tpu.memory_space<vmem>>, vector<1x1x8x8xf32>
    %3 = vector.shape_cast %2 : vector<1x1x8x8xf32> to vector<8x8xf32>
    %c0_7 = arith.constant 0 : index
    %c0_8 = arith.constant 0 : index
    %c0_9 = arith.constant 0 : index
    %c0_10 = arith.constant 0 : index
    %4 = vector.load %arg4[%c0_7, %c0_8, %c0_9, %c0_10] : memref<1x1x8x32xf32, #tpu.memory_space<vmem>>, vector<1x1x8x8xf32>
    %5 = vector.shape_cast %4 : vector<1x1x8x8xf32> to vector<8x8xf32>
    %cst = arith.constant dense<0.000000e+00> : vector<8x8xf32>
    %6 = tpu.matmul %1, %3, %cst {dimension_numbers = #tpu.dot_dimension_numbers<[1], [1], [0], [0], [0, 0, 1, 0], [], []>} : vector<8x8xf32>, vector<8x8xf32>, vector<8x8xf32> -> vector<8x8xf32>
    %cst_11 = arith.constant dense<0xFF800000> : vector<8xf32>
    %7 = vector.multi_reduction <maximumf>, %6, %cst_11 [1] : vector<8x8xf32> to vector<8xf32>
    %8 = vector.shape_cast %7 : vector<8xf32> to vector<8x1xf32>
    %9 = vector.broadcast %8 : vector<8x1xf32> to vector<8x8xf32>
    %10 = arith.subf %6, %9 : vector<8x8xf32>
    %11 = math.exp %10 : vector<8x8xf32>
    %cst_12 = arith.constant dense<0.000000e+00> : vector<8xf32>
    %12 = vector.multi_reduction <add>, %11, %cst_12 [1] : vector<8x8xf32> to vector<8xf32>
    %13 = vector.shape_cast %12 : vector<8xf32> to vector<8x1xf32>
    %cst_13 = arith.constant dense<0.000000e+00> : vector<8x8xf32>
    %14 = tpu.matmul %11, %5, %cst_13 {dimension_numbers = #tpu.dot_dimension_numbers<[1], [0], [0], [1], [0, 0, 1, 1], [], []>} : vector<8x8xf32>, vector<8x8xf32>, vector<8x8xf32> -> vector<8x8xf32>
    %15 = tpu.reciprocal %13 {approx = true} : vector<8x1xf32> -> vector<8x1xf32>
    %16 = vector.broadcast %15 : vector<8x1xf32> to vector<8x8xf32>
    %17 = arith.mulf %14, %16 : vector<8x8xf32>
    %c0_14 = arith.constant 0 : index
    %c0_15 = arith.constant 0 : index
    %c0_16 = arith.constant 0 : index
    %18 = vector.load %arg5[%c0_14, %c0_15, %c0_16] : memref<1x8x32xf32, #tpu.memory_space<vmem>>, vector<1x8x8xf32>
    %19 = vector.shape_cast %18 : vector<1x8x8xf32> to vector<8x8xf32>
    %20 = vector.shape_cast %17 : vector<8x8xf32> to vector<1x8x8xf32>
    tpu.vector_store %arg5[%c0_14, %c0_15, %c0_16], %20 {strides = array<i32>} : memref<1x8x32xf32, #tpu.memory_space<vmem>>, vector<1x8x8xf32>,
    %c0_17 = arith.constant 0 : index
    %c0_18 = arith.constant 0 : index
    %c0_19 = arith.constant 0 : index
    %c8 = arith.constant 8 : index
    %21 = vector.load %arg2[%c0_17, %c0_18, %c0_19, %c8] : memref<1x1x8x32xf32, #tpu.memory_space<vmem>>, vector<1x1x8x8xf32>
    %22 = vector.shape_cast %21 : vector<1x1x8x8xf32> to vector<8x8xf32>
    %c0_20 = arith.constant 0 : index
    %c0_21 = arith.constant 0 : index
    %c0_22 = arith.constant 0 : index
    %c8_23 = arith.constant 8 : index
    %23 = vector.load %arg3[%c0_20, %c0_21, %c0_22, %c8_23] : memref<1x1x8x32xf32, #tpu.memory_space<vmem>>, vector<1x1x8x8xf32>
    %24 = vector.shape_cast %23 : vector<1x1x8x8xf32> to vector<8x8xf32>
    %c0_24 = arith.constant 0 : index
    %c0_25 = arith.constant 0 : index
    %c0_26 = arith.constant 0 : index
    %c8_27 = arith.constant 8 : index
    %25 = vector.load %arg4[%c0_24, %c0_25, %c0_26, %c8_27] : memref<1x1x8x32xf32, #tpu.memory_space<vmem>>, vector<1x1x8x8xf32>
    %26 = vector.shape_cast %25 : vector<1x1x8x8xf32> to vector<8x8xf32>
    %cst_28 = arith.constant dense<0.000000e+00> : vector<8x8xf32>
    %27 = tpu.matmul %22, %24, %cst_28 {dimension_numbers = #tpu.dot_dimension_numbers<[1], [1], [0], [0], [0, 0, 1, 0], [], []>} : vector<8x8xf32>, vector<8x8xf32>, vector<8x8xf32> -> vector<8x8xf32>
    %cst_29 = arith.constant dense<0xFF800000> : vector<8xf32>
    %28 = vector.multi_reduction <maximumf>, %27, %cst_29 [1] : vector<8x8xf32> to vector<8xf32>
    %29 = vector.shape_cast %28 : vector<8xf32> to vector<8x1xf32>
    %30 = vector.broadcast %29 : vector<8x1xf32> to vector<8x8xf32>
    %31 = arith.subf %27, %30 : vector<8x8xf32>
    %32 = math.exp %31 : vector<8x8xf32>
    %cst_30 = arith.constant dense<0.000000e+00> : vector<8xf32>
    %33 = vector.multi_reduction <add>, %32, %cst_30 [1] : vector<8x8xf32> to vector<8xf32>
    %34 = vector.shape_cast %33 : vector<8xf32> to vector<8x1xf32>
    %cst_31 = arith.constant dense<0.000000e+00> : vector<8x8xf32>
    %35 = tpu.matmul %32, %26, %cst_31 {dimension_numbers = #tpu.dot_dimension_numbers<[1], [0], [0], [1], [0, 0, 1, 1], [], []>} : vector<8x8xf32>, vector<8x8xf32>, vector<8x8xf32> -> vector<8x8xf32>
    %36 = tpu.reciprocal %34 {approx = true} : vector<8x1xf32> -> vector<8x1xf32>
    %37 = vector.broadcast %36 : vector<8x1xf32> to vector<8x8xf32>
    %38 = arith.mulf %35, %37 : vector<8x8xf32>
    %c0_32 = arith.constant 0 : index
    %c0_33 = arith.constant 0 : index
    %c8_34 = arith.constant 8 : index
    %39 = vector.load %arg5[%c0_32, %c0_33, %c8_34] : memref<1x8x32xf32, #tpu.memory_space<vmem>>, vector<1x8x8xf32>
    %40 = vector.shape_cast %39 : vector<1x8x8xf32> to vector<8x8xf32>
    %41 = vector.shape_cast %38 : vector<8x8xf32> to vector<1x8x8xf32>
    tpu.vector_store %arg5[%c0_32, %c0_33, %c8_34], %41 {strides = array<i32>} : memref<1x8x32xf32, #tpu.memory_space<vmem>>, vector<1x8x8xf32>,
    %c0_35 = arith.constant 0 : index
    %c0_36 = arith.constant 0 : index
    %c0_37 = arith.constant 0 : index
    %c16 = arith.constant 16 : index
    %42 = vector.load %arg2[%c0_35, %c0_36, %c0_37, %c16] : memref<1x1x8x32xf32, #tpu.memory_space<vmem>>, vector<1x1x8x8xf32>
    %43 = vector.shape_cast %42 : vector<1x1x8x8xf32> to vector<8x8xf32>
    %c0_38 = arith.constant 0 : index
    %c0_39 = arith.constant 0 : index
    %c0_40 = arith.constant 0 : index
    %c16_41 = arith.constant 16 : index
    %44 = vector.load %arg3[%c0_38, %c0_39, %c0_40, %c16_41] : memref<1x1x8x32xf32, #tpu.memory_space<vmem>>, vector<1x1x8x8xf32>
    %45 = vector.shape_cast %44 : vector<1x1x8x8xf32> to vector<8x8xf32>
    %c0_42 = arith.constant 0 : index
    %c0_43 = arith.constant 0 : index
    %c0_44 = arith.constant 0 : index
    %c16_45 = arith.constant 16 : index
    %46 = vector.load %arg4[%c0_42, %c0_43, %c0_44, %c16_45] : memref<1x1x8x32xf32, #tpu.memory_space<vmem>>, vector<1x1x8x8xf32>
    %47 = vector.shape_cast %46 : vector<1x1x8x8xf32> to vector<8x8xf32>
    %cst_46 = arith.constant dense<0.000000e+00> : vector<8x8xf32>
    %48 = tpu.matmul %43, %45, %cst_46 {dimension_numbers = #tpu.dot_dimension_numbers<[1], [1], [0], [0], [0, 0, 1, 0], [], []>} : vector<8x8xf32>, vector<8x8xf32>, vector<8x8xf32> -> vector<8x8xf32>
    %cst_47 = arith.constant dense<0xFF800000> : vector<8xf32>
    %49 = vector.multi_reduction <maximumf>, %48, %cst_47 [1] : vector<8x8xf32> to vector<8xf32>
    %50 = vector.shape_cast %49 : vector<8xf32> to vector<8x1xf32>
    %51 = vector.broadcast %50 : vector<8x1xf32> to vector<8x8xf32>
    %52 = arith.subf %48, %51 : vector<8x8xf32>
    %53 = math.exp %52 : vector<8x8xf32>
    %cst_48 = arith.constant dense<0.000000e+00> : vector<8xf32>
    %54 = vector.multi_reduction <add>, %53, %cst_48 [1] : vector<8x8xf32> to vector<8xf32>
    %55 = vector.shape_cast %54 : vector<8xf32> to vector<8x1xf32>
    %cst_49 = arith.constant dense<0.000000e+00> : vector<8x8xf32>
    %56 = tpu.matmul %53, %47, %cst_49 {dimension_numbers = #tpu.dot_dimension_numbers<[1], [0], [0], [1], [0, 0, 1, 1], [], []>} : vector<8x8xf32>, vector<8x8xf32>, vector<8x8xf32> -> vector<8x8xf32>
    %57 = tpu.reciprocal %55 {approx = true} : vector<8x1xf32> -> vector<8x1xf32>
    %58 = vector.broadcast %57 : vector<8x1xf32> to vector<8x8xf32>
    %59 = arith.mulf %56, %58 : vector<8x8xf32>
    %c0_50 = arith.constant 0 : index
    %c0_51 = arith.constant 0 : index
    %c16_52 = arith.constant 16 : index
    %60 = vector.load %arg5[%c0_50, %c0_51, %c16_52] : memref<1x8x32xf32, #tpu.memory_space<vmem>>, vector<1x8x8xf32>
    %61 = vector.shape_cast %60 : vector<1x8x8xf32> to vector<8x8xf32>
    %62 = vector.shape_cast %59 : vector<8x8xf32> to vector<1x8x8xf32>
    tpu.vector_store %arg5[%c0_50, %c0_51, %c16_52], %62 {strides = array<i32>} : memref<1x8x32xf32, #tpu.memory_space<vmem>>, vector<1x8x8xf32>,
    %c0_53 = arith.constant 0 : index
    %c0_54 = arith.constant 0 : index
    %c0_55 = arith.constant 0 : index
    %c24 = arith.constant 24 : index
    %63 = vector.load %arg2[%c0_53, %c0_54, %c0_55, %c24] : memref<1x1x8x32xf32, #tpu.memory_space<vmem>>, vector<1x1x8x8xf32>
    %64 = vector.shape_cast %63 : vector<1x1x8x8xf32> to vector<8x8xf32>
    %c0_56 = arith.constant 0 : index
    %c0_57 = arith.constant 0 : index
    %c0_58 = arith.constant 0 : index
    %c24_59 = arith.constant 24 : index
    %65 = vector.load %arg3[%c0_56, %c0_57, %c0_58, %c24_59] : memref<1x1x8x32xf32, #tpu.memory_space<vmem>>, vector<1x1x8x8xf32>
    %66 = vector.shape_cast %65 : vector<1x1x8x8xf32> to vector<8x8xf32>
    %c0_60 = arith.constant 0 : index
    %c0_61 = arith.constant 0 : index
    %c0_62 = arith.constant 0 : index
    %c24_63 = arith.constant 24 : index
    %67 = vector.load %arg4[%c0_60, %c0_61, %c0_62, %c24_63] : memref<1x1x8x32xf32, #tpu.memory_space<vmem>>, vector<1x1x8x8xf32>
    %68 = vector.shape_cast %67 : vector<1x1x8x8xf32> to vector<8x8xf32>
    %cst_64 = arith.constant dense<0.000000e+00> : vector<8x8xf32>
    %69 = tpu.matmul %64, %66, %cst_64 {dimension_numbers = #tpu.dot_dimension_numbers<[1], [1], [0], [0], [0, 0, 1, 0], [], []>} : vector<8x8xf32>, vector<8x8xf32>, vector<8x8xf32> -> vector<8x8xf32>
    %cst_65 = arith.constant dense<0xFF800000> : vector<8xf32>
    %70 = vector.multi_reduction <maximumf>, %69, %cst_65 [1] : vector<8x8xf32> to vector<8xf32>
    %71 = vector.shape_cast %70 : vector<8xf32> to vector<8x1xf32>
    %72 = vector.broadcast %71 : vector<8x1xf32> to vector<8x8xf32>
    %73 = arith.subf %69, %72 : vector<8x8xf32>
    %74 = math.exp %73 : vector<8x8xf32>
    %cst_66 = arith.constant dense<0.000000e+00> : vector<8xf32>
    %75 = vector.multi_reduction <add>, %74, %cst_66 [1] : vector<8x8xf32> to vector<8xf32>
    %76 = vector.shape_cast %75 : vector<8xf32> to vector<8x1xf32>
    %cst_67 = arith.constant dense<0.000000e+00> : vector<8x8xf32>
    %77 = tpu.matmul %74, %68, %cst_67 {dimension_numbers = #tpu.dot_dimension_numbers<[1], [0], [0], [1], [0, 0, 1, 1], [], []>} : vector<8x8xf32>, vector<8x8xf32>, vector<8x8xf32> -> vector<8x8xf32>
    %78 = tpu.reciprocal %76 {approx = true} : vector<8x1xf32> -> vector<8x1xf32>
    %79 = vector.broadcast %78 : vector<8x1xf32> to vector<8x8xf32>
    %80 = arith.mulf %77, %79 : vector<8x8xf32>
    %c0_68 = arith.constant 0 : index
    %c0_69 = arith.constant 0 : index
    %c24_70 = arith.constant 24 : index
    %81 = vector.load %arg5[%c0_68, %c0_69, %c24_70] : memref<1x8x32xf32, #tpu.memory_space<vmem>>, vector<1x8x8xf32>
    %82 = vector.shape_cast %81 : vector<1x8x8xf32> to vector<8x8xf32>
    %83 = vector.shape_cast %80 : vector<8x8xf32> to vector<1x8x8xf32>
    tpu.vector_store %arg5[%c0_68, %c0_69, %c24_70], %83 {strides = array<i32>} : memref<1x8x32xf32, #tpu.memory_space<vmem>>, vector<1x8x8xf32>,
    return
  }
  func.func @transform_0(%arg0: i32, %arg1: i32) -> (i32, i32, i32, i32) {
    %c0_i32 = arith.constant 0 : i32
    %c0_i32_0 = arith.constant 0 : i32
    %c0_i32_1 = arith.constant 0 : i32
    return %c0_i32, %arg0, %arg1, %c0_i32_0 : i32, i32, i32, i32
  }
  func.func @transform_1(%arg0: i32, %arg1: i32) -> (i32, i32, i32, i32) {
    %c1_i32 = arith.constant 1 : i32
    %c0_i32 = arith.constant 0 : i32
    %c0_i32_0 = arith.constant 0 : i32
    %c0_i32_1 = arith.constant 0 : i32
    return %c1_i32, %arg0, %c0_i32, %c0_i32_0 : i32, i32, i32, i32
  }
  func.func @transform_2(%arg0: i32, %arg1: i32) -> (i32, i32, i32, i32) {
    %c2_i32 = arith.constant 2 : i32
    %c0_i32 = arith.constant 0 : i32
    %c0_i32_0 = arith.constant 0 : i32
    %c0_i32_1 = arith.constant 0 : i32
    return %c2_i32, %arg0, %c0_i32, %c0_i32_0 : i32, i32, i32, i32
  }
  func.func @transform_3(%arg0: i32, %arg1: i32) -> (i32, i32, i32) {
    %c0_i32 = arith.constant 0 : i32
    %c0_i32_0 = arith.constant 0 : i32
    return %arg0, %arg1, %c0_i32 : i32, i32, i32
  }
}

</mosaic_0001>

<llo_original>
// kernel: mha_forward.5
$region0: #{mha_forward.5}
  #allocation0 [shape = 'u32[]', space=smem, size = 0x4, offset = 0x4, fixed_abs, tag = 'smem constant byte address 0x4 - core index']
  #allocation1 [shape = 'u32[144,128]{1,0:T(1,128)}', space=vmem, size = 0x12000, scoped, tag = 'internal scratch']
  %s0 = inlined_call_operand.vmem [shape: f32[16,32], index: 0, kind: input, shape index: {}]
  %s1 = inlined_call_operand.vmem [shape: f32[1,32,32], index: 1, kind: input, shape index: {}]
  %s2 = inlined_call_operand.vmem [shape: f32[1,1,32], index: 2, kind: input, shape index: {}]
  %s3 = inlined_call_operand.hbm [shape: f32[1,16,32], index: 3, kind: output, shape index: {}]
  %s4 = sld [smem:[#allocation0]]
  $region22: #{mha_forward.5} parent=0
    _
  %s6 = ssub.s32 1, %s4
  %s7 = scalar_select 0, %s6, %s4
  $region1: #{mha_forward.5} parent=0
    #allocation2 [shape = 'u8[8192]{0}', space=vmem, size = 0x2000, scoped, tag = 'output window, operand 0, single buffered']
    #allocation3 [shape = 's32[1]{0}', space=sflag, size = 0x4, scoped, tag = 'scoped memory for mha_forward.5']
    %8 = vsyncpa [#allocation3], 0
    // Predicated region
    $region2: #{mha_forward.5} parent=1 // pred_check
      _
    $region3: #{mha_forward.5} parent=1 // pred_check_branch
      %10 = sbr.rel (0) target = $region5
    $region4: #{mha_forward.5} parent=1 // pred_region
      _
    $region5: #{mha_forward.5} parent=1 // pred_fallthru
      _
    // Predicated region
    $region6: #{mha_forward.5} parent=1 // pred_check
      _
    $region7: #{mha_forward.5} parent=1 // pred_check_branch
      %12 = sbr.rel (0) target = $region9
    $region8: #{mha_forward.5} parent=1 // pred_region
      _
    $region9: #{mha_forward.5} parent=1 // pred_fallthru
      _
    // Predicated region
    $region10: #{mha_forward.5} parent=1 // pred_check
      _
    $region11: #{mha_forward.5} parent=1 // pred_check_branch
      %14 = sbr.rel (0) target = $region13
    $region12: #{mha_forward.5} parent=1 // pred_region
      _
    $region13: #{mha_forward.5} parent=1 // pred_fallthru
      _
    %v15 = vld [vmem:[%s0] sm:$0xff]
    %v16 = vld [vmem:[%s0 + $0x8] sm:$0xff]
    %v17 = vld [vmem:[%s1] sm:$0xff]
    %v18 = vld [vmem:[%s1 + $0x8] sm:$0xff]
    %v19 = vld [vmem:[%s1 + $0x10] sm:$0xff]
    %v20 = vld [vmem:[%s1 + $0x18] sm:$0xff]
    %v21 = vld [vmem:[%s2] sm:$0x1]
    %v23 = vlaneseq
    %v24 = vshrl.u32 %v23, 7
    %v25 = vsub.s32 0, %v24
    %v26 = vrot.slane %v21, %v25
    %vm28 = vcmask 261120
    %v30 = vsel %vm28, %v15, 0
    %v33 = vsel %vm28, %v16, 0
    %35 = vmatprep.subr.mxu0 0.0
    %36 = vmatpush1.msra.mxu0 %v17
    %37 = vmatprep.subr.mxu0 0.0
    %38 = vmatpush1.msra.mxu0 %v18
    %39 = vmatprep.subr.mxu0 0.0
    %40 = vmatpush1.msra.mxu0 %v19
    %41 = vmatprep.subr.mxu0 0.0
    %42 = vmatpush1.msra.mxu0 %v20
    %43 = vmatprep.subr.mxu0 0.0
    %44 = vmatpush1.msra.mxu0 0.0
    %45 = vmatprep.subr.mxu0 0.0
    %46 = vmatpush1.msra.mxu0 0.0
    %47 = vmatprep.subr.mxu0 0.0
    %48 = vmatpush1.msra.mxu0 0.0
    %49 = vmatprep.subr.mxu0 0.0
    %50 = vmatpush1.msra.mxu0 0.0
    %51 = vmatprep.subr.mxu0 0.0
    %52 = vmatpush1.msra.mxu0 0.0
    %53 = vmatprep.subr.mxu0 0.0
    %54 = vmatpush1.msra.mxu0 0.0
    %55 = vmatprep.subr.mxu0 0.0
    %56 = vmatpush1.msra.mxu0 0.0
    %57 = vmatprep.subr.mxu0 0.0
    %58 = vmatpush1.msra.mxu0 0.0
    %59 = vmatprep.subr.mxu0 0.0
    %60 = vmatpush1.msra.mxu0 0.0
    %61 = vmatprep.subr.mxu0 0.0
    %62 = vmatpush1.msra.mxu0 0.0
    %63 = vmatprep.subr.mxu0 0.0
    %64 = vmatpush1.msra.mxu0 0.0
    %65 = vmatprep.subr.mxu0 0.0
    %66 = vmatpush1.msra.mxu0 0.0
    %67 = vmatprep.subr.mxu0 0.0
    %68 = vmatpush1.msra.mxu0 0.0
    %69 = vmatprep.subr.mxu0 0.0
    %70 = vmatpush1.msra.mxu0 0.0
    %71 = vmatprep.subr.mxu0 0.0
    %72 = vmatpush1.msra.mxu0 0.0
    %73 = vmatprep.subr.mxu0 0.0
    %74 = vmatpush1.msra.mxu0 0.0
    %75 = vmatprep.subr.mxu0 0.0
    %76 = vmatpush1.msra.mxu0 0.0
    %77 = vmatprep.subr.mxu0 0.0
    %78 = vmatpush1.msra.mxu0 0.0
    %79 = vmatprep.subr.mxu0 0.0
    %80 = vmatpush1.msra.mxu0 0.0
    %81 = vmatprep.subr.mxu0 0.0
    %82 = vmatpush1.msra.mxu0 0.0
    %83 = vmatprep.subr.mxu0 0.0
    %84 = vmatpush1.msra.mxu0 0.0
    %85 = vmatprep.subr.mxu0 0.0
    %86 = vmatpush1.msra.mxu0 0.0
    %87 = vmatprep.subr.mxu0 0.0
    %88 = vmatpush1.msra.mxu0 0.0
    %89 = vmatprep.subr.mxu0 0.0
    %90 = vmatpush1.msra.mxu0 0.0
    %91 = vmatprep.subr.mxu0 0.0
    %92 = vmatpush1.msra.mxu0 0.0
    %93 = vmatprep.subr.mxu0 0.0
    %94 = vmatpush1.msra.mxu0 0.0
    %95 = vmatprep.subr.mxu0 0.0
    %96 = vmatpush1.msra.mxu0 0.0
    %97 = vmatprep.subr.mxu0 0.0
    %98 = vmatpush1.msra.mxu0 0.0
    %99 = vmatprep.mubr.f32.mxu0 0.0
    %100 = vmatmul.mubr.f32.gmra.mrb[0].mxu0 %v30
    %v101 = vpop.f32.mrb[0].mxu0
    %v102 = vadd.f32 %v26, %v101
    %v103 = vpop.f32.mrb[0].mxu0
    %104 = vmatprep.mubr.f32.mxu0 0.0
    %105 = vmatmul.mubr.f32.gmra.mrb[0].mxu0 %v33
    %v106 = vpop.f32.mrb[0].mxu0
    %v107 = vadd.f32 %v26, %v106
    %v108 = vpop.f32.mrb[0].mxu0
    %109 = vdwg.mxu0
    %110 = vst.msk [vmem:[#allocation2] sm:$0xff] %vm28, %v102
    %111 = vst.msk [vmem:[#allocation2 + $0x8] sm:$0xff] %vm28, %v107
    // Predicated region
    $region14: #{mha_forward.5} parent=1 // pred_check
      _
    $region15: #{mha_forward.5} parent=1 // pred_check_branch
      %113 = sbr.rel (0) target = $region17
    $region16: #{mha_forward.5} parent=1 // pred_region
      %s115 = ssub.s32 256, 256
      %116 = vsyncadd [#allocation3], %s115
      %s117 = sshll.u32 [#allocation2], 4
      %s118 = int_to_ptr.vmem [resolvable:$true] %s117
      %123 = dma.vmem_to_hbm [thread:$0]  %s118, 256, %s3, [#allocation3], 128, 128, 8
    $region17: #{mha_forward.5} parent=1 // pred_fallthru
      _
    // Predicated region
    $region18: #{mha_forward.5} parent=1 // pred_check
      _
    $region19: #{mha_forward.5} parent=1 // pred_check_branch
      %125 = sbr.rel (0) target = $region21
    $region20: #{mha_forward.5} parent=1 // pred_region
      %126 = dma.done [#allocation3], 256
    $region21: #{mha_forward.5} parent=1 // pred_fallthru
      _
    %127 = vsyncpa [#allocation3], 1

// kernel: mha_forward.3
$region0: #{mha_forward.3}
  #allocation0 [shape = 'u32[]', space=smem, size = 0x4, offset = 0x4, fixed_abs, tag = 'smem constant byte address 0x4 - core index']
  #allocation1 [shape = 'u32[144,128]{1,0:T(1,128)}', space=vmem, size = 0x12000, scoped, tag = 'internal scratch']
  %s0 = inlined_call_operand.vmem [shape: f32[16,32], index: 0, kind: input, shape index: {}]
  %s1 = inlined_call_operand.vmem [shape: f32[3,32,32], index: 1, kind: input, shape index: {}]
  %s2 = inlined_call_operand.vmem [shape: f32[3,1,32], index: 2, kind: input, shape index: {}]
  %s3 = inlined_call_operand.vmem [shape: f32[3,16,32], index: 3, kind: output, shape index: {}]
  %s4 = sld [smem:[#allocation0]]
  $region45: #{mha_forward.3} parent=0
    _
  %s6 = ssub.s32 1, %s4
  %s7 = scalar_select 0, %s6, %s4
  loop: start=0, step=1, limit=5
  $region2: #{mha_forward.3} parent=0 // loop_pre_header
    _
  $region3: #{mha_forward.3} parent=0 // loop_header
    %s9 = sphi 0, %s13
    %p10 = scmp.ge.s32.totalorder %s9, 5
    %s16 = sphi 0, %s35
    %s17 = sphi 0, %s31
    %s18 = sphi 0, %s27
    %s19 = sphi 0, %s16
    %s20 = sphi 0, %s17
    %s21 = sphi 0, %s18
    %s22 = sphi 0, %s19
    %s23 = sphi 0, %s20
    %s24 = sphi 0, %s21
    %s38 = sphi 0, %s40
    %s41 = sphi 0, %s38
    %s42 = sphi 0, %s41
    %s58 = sphi 0, %s42
    %s66 = sphi 0, %s68
    %s69 = sphi 0, %s66
    %s70 = sphi 0, %s69
    %s86 = sphi 0, %s70
    %s94 = sphi 0, %s96
    %s97 = sphi 0, %s94
    %s98 = sphi 0, %s97
    %s114 = sphi 0, %s98
    %s124 = sphi 0, %s126
    %s127 = sphi 0, %s124
    %s128 = sphi 0, %s127
    %s144 = sphi 0, %s128
  $region4: #{mha_forward.3} parent=0 // loop_header_branch
    %12 = sbr.rel (%p10) target = $region8
  $region5: #{mha_forward.3} parent=0 // loop_body
    %s14 = ssub.s32 %s9, 1
    %s15 = ssub.s32 %s9, 2
    %s25 = sadd.s32 1, %s18
    %p26 = scmp.ge.s32.totalorder %s25, 1
    %s27 = scalar_select %p26, 0, %s25
    %s28 = sadd.s32 1, %s17
    %s29 = scalar_select %p26, %s28, %s17
    %p30 = scmp.ge.s32.totalorder %s29, 1
    %s31 = scalar_select %p30, 0, %s29
    %s32 = sadd.s32 1, %s16
    %s33 = scalar_select %p30, %s32, %s16
    %p34 = scmp.ge.s32.totalorder %s33, 3
    %s35 = scalar_select %p34, 0, %s33
    %s36 = ssub.s32 %s18, %s27
    %p37 = scmp.eq.s32.totalorder %s36, 0
    %s39 = sadd.s32 %s38, 1
    %s40 = scalar_select %p37, %s38, %s39
    %p43 = pneg %p37
    %p44 = scmp.eq.s32.totalorder %s9, 2
    %p45 = por %p43, %p44
    %p46 = scmp.ne.s32.totalorder %s38, %s41
    %p47 = scmp.eq.s32.totalorder %s9, 0
    %p48 = por %p46, %p47
    %p49 = scmp.ne.s32.totalorder %s38, %s41
    %p50 = scmp.eq.s32.totalorder %s14, 2
    %p51 = por %p49, %p50
    %p52 = scmp.ne.s32.totalorder %s41, %s42
    %p53 = scmp.eq.s32.totalorder %s14, 0
    %p54 = por %p52, %p53
    %p55 = scmp.ne.s32.totalorder %s41, %s42
    %p56 = scmp.eq.s32.totalorder %s15, 2
    %p57 = por %p55, %p56
    %p59 = scmp.ne.s32.totalorder %s42, %s58
    %p60 = scmp.eq.s32.totalorder %s15, 0
    %p61 = por %p59, %p60
    %s62 = ssub.s32 %s16, %s35
    %s63 = ssub.s32 %s17, %s31
    %s64 = sor.u32 %s62, %s63
    %p65 = scmp.eq.s32.totalorder %s64, 0
    %s67 = sadd.s32 %s66, 1
    %s68 = scalar_select %p65, %s66, %s67
    %p71 = pneg %p65
    %p72 = scmp.eq.s32.totalorder %s9, 2
    %p73 = por %p71, %p72
    %p74 = scmp.ne.s32.totalorder %s66, %s69
    %p75 = scmp.eq.s32.totalorder %s9, 0
    %p76 = por %p74, %p75
    %p77 = scmp.ne.s32.totalorder %s66, %s69
    %p78 = scmp.eq.s32.totalorder %s14, 2
    %p79 = por %p77, %p78
    %p80 = scmp.ne.s32.totalorder %s69, %s70
    %p81 = scmp.eq.s32.totalorder %s14, 0
    %p82 = por %p80, %p81
    %p83 = scmp.ne.s32.totalorder %s69, %s70
    %p84 = scmp.eq.s32.totalorder %s15, 2
    %p85 = por %p83, %p84
    %p87 = scmp.ne.s32.totalorder %s70, %s86
    %p88 = scmp.eq.s32.totalorder %s15, 0
    %p89 = por %p87, %p88
    %s90 = ssub.s32 %s16, %s35
    %s91 = ssub.s32 %s17, %s31
    %s92 = sor.u32 %s90, %s91
    %p93 = scmp.eq.s32.totalorder %s92, 0
    %s95 = sadd.s32 %s94, 1
    %s96 = scalar_select %p93, %s94, %s95
    %p99 = pneg %p93
    %p100 = scmp.eq.s32.totalorder %s9, 2
    %p101 = por %p99, %p100
    %p102 = scmp.ne.s32.totalorder %s94, %s97
    %p103 = scmp.eq.s32.totalorder %s9, 0
    %p104 = por %p102, %p103
    %p105 = scmp.ne.s32.totalorder %s94, %s97
    %p106 = scmp.eq.s32.totalorder %s14, 2
    %p107 = por %p105, %p106
    %p108 = scmp.ne.s32.totalorder %s97, %s98
    %p109 = scmp.eq.s32.totalorder %s14, 0
    %p110 = por %p108, %p109
    %p111 = scmp.ne.s32.totalorder %s97, %s98
    %p112 = scmp.eq.s32.totalorder %s15, 2
    %p113 = por %p111, %p112
    %p115 = scmp.ne.s32.totalorder %s98, %s114
    %p116 = scmp.eq.s32.totalorder %s15, 0
    %p117 = por %p115, %p116
    %s118 = ssub.s32 %s16, %s35
    %s119 = ssub.s32 %s18, %s27
    %s120 = sor.u32 %s118, %s119
    %s121 = ssub.s32 %s17, %s31
    %s122 = sor.u32 %s120, %s121
    %p123 = scmp.eq.s32.totalorder %s122, 0
    %s125 = sadd.s32 %s124, 1
    %s126 = scalar_select %p123, %s124, %s125
    %p129 = pneg %p123
    %p130 = scmp.eq.s32.totalorder %s9, 2
    %p131 = por %p129, %p130
    %p132 = scmp.ne.s32.totalorder %s124, %s127
    %p133 = scmp.eq.s32.totalorder %s9, 0
    %p134 = por %p132, %p133
    %p135 = scmp.ne.s32.totalorder %s124, %s127
    %p136 = scmp.eq.s32.totalorder %s14, 2
    %p137 = por %p135, %p136
    %p138 = scmp.ne.s32.totalorder %s127, %s128
    %p139 = scmp.eq.s32.totalorder %s14, 0
    %p140 = por %p138, %p139
    %p141 = scmp.ne.s32.totalorder %s127, %s128
    %p142 = scmp.eq.s32.totalorder %s15, 2
    %p143 = por %p141, %p142
    %p145 = scmp.ne.s32.totalorder %s128, %s144
    %p146 = scmp.eq.s32.totalorder %s15, 0
    %p147 = por %p145, %p146
    %p148 = scmp.le.s32.totalorder 1, %s9
    %p149 = scmp.lt.s32.totalorder %s9, 4
    %p150 = pnand %p148, %p149
    %p151 = pneg %p150
    // Predicated region
    $region9: #{mha_forward.3} parent=5 // pred_check
      _
    $region10: #{mha_forward.3} parent=5 // pred_check_branch
      %153 = sbr.rel (%p150) target = $region12
    $region11: #{mha_forward.3} parent=5 // pred_region
      %s154 = ssub.s32 %s9, 1
      // Predicated region
      $region13: #{mha_forward.3} parent=11 // pred_check
        %p155 = pneg %p54
      $region14: #{mha_forward.3} parent=11 // pred_check_branch
        %157 = sbr.rel (%p155) target = $region16
      $region15: #{mha_forward.3} parent=11 // pred_region
        %s158 = smul.u32 2, %s21
        %p159 = scmp.lt.s32.totalorder %s158, 1
        %s160 = scalar_select %p159, %s158, 1
        %s161 = smul.addr %s160, 8
        %s162 = scalar_lea.vmem %s0, %s161
        %s163 = smul.u32 2, %s21
      $region16: #{mha_forward.3} parent=11 // pred_fallthru
        _
    $region12: #{mha_forward.3} parent=5 // pred_fallthru
      _
    %p164 = scmp.lt.s32.totalorder %s9, 3
    // Predicated region
    $region17: #{mha_forward.3} parent=5 // pred_check
      %p165 = pneg %p164
    $region18: #{mha_forward.3} parent=5 // pred_check_branch
      %167 = sbr.rel (%p165) target = $region20
    $region19: #{mha_forward.3} parent=5 // pred_region
      // Predicated region
      $region21: #{mha_forward.3} parent=19 // pred_check
        %p168 = pneg %p76
      $region22: #{mha_forward.3} parent=19 // pred_check_branch
        %170 = sbr.rel (%p168) target = $region24
      $region23: #{mha_forward.3} parent=19 // pred_region
        %p171 = scmp.lt.s32.totalorder %s16, 2
        %s172 = scalar_select %p171, %s16, 2
        %p173 = scmp.lt.s32.totalorder %s17, 0
        %s174 = scalar_select %p173, %s17, 0
        %s175 = smul.addr %s172, 4
        %s176 = sadd.s32 %s174, %s175
        %s177 = smul.addr %s176, 8
        %s178 = scalar_lea.vmem %s1, %s177
      $region24: #{mha_forward.3} parent=19 // pred_fallthru
        _
      // Predicated region
      $region25: #{mha_forward.3} parent=19 // pred_check
        %p179 = pneg %p104
      $region26: #{mha_forward.3} parent=19 // pred_check_branch
        %181 = sbr.rel (%p179) target = $region28
      $region27: #{mha_forward.3} parent=19 // pred_region
        %p182 = scmp.lt.s32.totalorder %s16, 2
        %s183 = scalar_select %p182, %s16, 2
        %p184 = scmp.lt.s32.totalorder %s17, 0
        %s185 = scalar_select %p184, %s17, 0
        %s186 = sadd.s32 %s185, %s183
        %s187 = scalar_lea.vmem %s2, %s186
      $region28: #{mha_forward.3} parent=19 // pred_fallthru
        _
    $region20: #{mha_forward.3} parent=5 // pred_fallthru
      _
    %p188 = scmp.le.s32.totalorder 1, %s9
    %p189 = scmp.lt.s32.totalorder %s9, 4
    %p190 = pnand %p188, %p189
    %p191 = pneg %p190
    // Predicated region
    $region29: #{mha_forward.3} parent=5 // pred_check
      _
    $region30: #{mha_forward.3} parent=5 // pred_check_branch
      %193 = sbr.rel (%p190) target = $region32
    $region31: #{mha_forward.3} parent=5 // pred_region
      %s194 = ssub.s32 %s9, 1
      %s195 = smul.u32 2, %s21
      %p196 = scmp.lt.s32.totalorder %s195, 1
      %s197 = scalar_select %p196, %s195, 1
      %s198 = smul.addr %s197, 8
      %s199 = scalar_lea.vmem %s0, %s198
      %p200 = pneg %p54
      %p201 = pneg %p51
      %p202 = scmp.lt.s32.totalorder %s19, 2
      %s203 = scalar_select %p202, %s19, 2
      %p204 = scmp.lt.s32.totalorder %s20, 0
      %s205 = scalar_select %p204, %s20, 0
      %s206 = smul.addr %s203, 4
      %s207 = sadd.s32 %s205, %s206
      %s208 = smul.addr %s207, 8
      %s209 = scalar_lea.vmem %s1, %s208
      %p210 = pneg %p82
      %p211 = pneg %p79
      %p212 = scmp.lt.s32.totalorder %s19, 2
      %s213 = scalar_select %p212, %s19, 2
      %p214 = scmp.lt.s32.totalorder %s20, 0
      %s215 = scalar_select %p214, %s20, 0
      %s216 = sadd.s32 %s215, %s213
      %s217 = scalar_lea.vmem %s2, %s216
      %p218 = pneg %p110
      %p219 = pneg %p107
      %p220 = pneg %p140
      %p221 = pneg %p137
      %s222 = smul.u32 2, %s21
      %p223 = scmp.lt.s32.totalorder %s19, 2
      %s224 = scalar_select %p223, %s19, 2
      %p225 = scmp.lt.s32.totalorder %s222, 1
      %s226 = scalar_select %p225, %s222, 1
      %p227 = scmp.lt.s32.totalorder %s20, 0
      %s228 = scalar_select %p227, %s20, 0
      %s229 = sadd.s32 %s228, %s226
      %s230 = smul.addr %s224, 2
      %s231 = sadd.s32 %s229, %s230
      %s232 = smul.addr %s231, 8
      %s233 = scalar_lea.vmem %s3, %s232
      %s234 = smul.u32 2, %s21
      %p235 = scmp.lt.s32.totalorder %s234, 1
      %s236 = scalar_select %p235, %s234, 1
      %s237 = smul.addr %s236, 8
      %s238 = scalar_lea.vmem %s0, %s237
      %s239 = smul.u32 2, %s21
      %p240 = scmp.lt.s32.totalorder %s19, 2
      %s241 = scalar_select %p240, %s19, 2
      %p242 = scmp.lt.s32.totalorder %s20, 0
      %s243 = scalar_select %p242, %s20, 0
      %s244 = smul.addr %s241, 4
      %s245 = sadd.s32 %s243, %s244
      %s246 = smul.addr %s245, 8
      %s247 = scalar_lea.vmem %s1, %s246
      %p248 = scmp.lt.s32.totalorder %s19, 2
      %s249 = scalar_select %p248, %s19, 2
      %p250 = scmp.lt.s32.totalorder %s20, 0
      %s251 = scalar_select %p250, %s20, 0
      %s252 = sadd.s32 %s251, %s249
      %s253 = scalar_lea.vmem %s2, %s252
      %s254 = smul.u32 2, %s21
      %p255 = scmp.lt.s32.totalorder %s19, 2
      %s256 = scalar_select %p255, %s19, 2
      %p257 = scmp.lt.s32.totalorder %s254, 1
      %s258 = scalar_select %p257, %s254, 1
      %p259 = scmp.lt.s32.totalorder %s20, 0
      %s260 = scalar_select %p259, %s20, 0
      %s261 = sadd.s32 %s260, %s258
      %s262 = smul.addr %s256, 2
      %s263 = sadd.s32 %s261, %s262
      %s264 = smul.addr %s263, 8
      %s265 = scalar_lea.vmem %s3, %s264
      %s266 = smul.u32 2, %s21
      %v267 = vld [vmem:[%s238] sm:$0xff]
      %v268 = vld [vmem:[%s238 + $0x8] sm:$0xff]
      %v269 = vld [vmem:[%s247] sm:$0xff]
      %v270 = vld [vmem:[%s247 + $0x8] sm:$0xff]
      %v271 = vld [vmem:[%s247 + $0x10] sm:$0xff]
      %v272 = vld [vmem:[%s247 + $0x18] sm:$0xff]
      %v273 = vld [vmem:[%s253] sm:$0x1]
      %v275 = vlaneseq
      %v276 = vshrl.u32 %v275, 7
      %v277 = vsub.s32 0, %v276
      %v278 = vrot.slane %v273, %v277
      %vm280 = vcmask 261120
      %v282 = vsel %vm280, %v267, 0
      %v285 = vsel %vm280, %v268, 0
      %287 = vmatprep.subr.mxu0 0.0
      %288 = vmatpush1.msra.mxu0 %v269
      %289 = vmatprep.subr.mxu0 0.0
      %290 = vmatpush1.msra.mxu0 %v270
      %291 = vmatprep.subr.mxu0 0.0
      %292 = vmatpush1.msra.mxu0 %v271
      %293 = vmatprep.subr.mxu0 0.0
      %294 = vmatpush1.msra.mxu0 %v272
      %295 = vmatprep.subr.mxu0 0.0
      %296 = vmatpush1.msra.mxu0 0.0
      %297 = vmatprep.subr.mxu0 0.0
      %298 = vmatpush1.msra.mxu0 0.0
      %299 = vmatprep.subr.mxu0 0.0
      %300 = vmatpush1.msra.mxu0 0.0
      %301 = vmatprep.subr.mxu0 0.0
      %302 = vmatpush1.msra.mxu0 0.0
      %303 = vmatprep.subr.mxu0 0.0
      %304 = vmatpush1.msra.mxu0 0.0
      %305 = vmatprep.subr.mxu0 0.0
      %306 = vmatpush1.msra.mxu0 0.0
      %307 = vmatprep.subr.mxu0 0.0
      %308 = vmatpush1.msra.mxu0 0.0
      %309 = vmatprep.subr.mxu0 0.0
      %310 = vmatpush1.msra.mxu0 0.0
      %311 = vmatprep.subr.mxu0 0.0
      %312 = vmatpush1.msra.mxu0 0.0
      %313 = vmatprep.subr.mxu0 0.0
      %314 = vmatpush1.msra.mxu0 0.0
      %315 = vmatprep.subr.mxu0 0.0
      %316 = vmatpush1.msra.mxu0 0.0
      %317 = vmatprep.subr.mxu0 0.0
      %318 = vmatpush1.msra.mxu0 0.0
      %319 = vmatprep.subr.mxu0 0.0
      %320 = vmatpush1.msra.mxu0 0.0
      %321 = vmatprep.subr.mxu0 0.0
      %322 = vmatpush1.msra.mxu0 0.0
      %323 = vmatprep.subr.mxu0 0.0
      %324 = vmatpush1.msra.mxu0 0.0
      %325 = vmatprep.subr.mxu0 0.0
      %326 = vmatpush1.msra.mxu0 0.0
      %327 = vmatprep.subr.mxu0 0.0
      %328 = vmatpush1.msra.mxu0 0.0
      %329 = vmatprep.subr.mxu0 0.0
      %330 = vmatpush1.msra.mxu0 0.0
      %331 = vmatprep.subr.mxu0 0.0
      %332 = vmatpush1.msra.mxu0 0.0
      %333 = vmatprep.subr.mxu0 0.0
      %334 = vmatpush1.msra.mxu0 0.0
      %335 = vmatprep.subr.mxu0 0.0
      %336 = vmatpush1.msra.mxu0 0.0
      %337 = vmatprep.subr.mxu0 0.0
      %338 = vmatpush1.msra.mxu0 0.0
      %339 = vmatprep.subr.mxu0 0.0
      %340 = vmatpush1.msra.mxu0 0.0
      %341 = vmatprep.subr.mxu0 0.0
      %342 = vmatpush1.msra.mxu0 0.0
      %343 = vmatprep.subr.mxu0 0.0
      %344 = vmatpush1.msra.mxu0 0.0
      %345 = vmatprep.subr.mxu0 0.0
      %346 = vmatpush1.msra.mxu0 0.0
      %347 = vmatprep.subr.mxu0 0.0
      %348 = vmatpush1.msra.mxu0 0.0
      %349 = vmatprep.subr.mxu0 0.0
      %350 = vmatpush1.msra.mxu0 0.0
      %351 = vmatprep.mubr.f32.mxu0 0.0
      %352 = vmatmul.mubr.f32.gmra.mrb[0].mxu0 %v282
      %v353 = vpop.f32.mrb[0].mxu0
      %v354 = vadd.f32 %v278, %v353
      %v355 = vpop.f32.mrb[0].mxu0
      %356 = vmatprep.mubr.f32.mxu0 0.0
      %357 = vmatmul.mubr.f32.gmra.mrb[0].mxu0 %v285
      %v358 = vpop.f32.mrb[0].mxu0
      %v359 = vadd.f32 %v278, %v358
      %v360 = vpop.f32.mrb[0].mxu0
      %361 = vdwg.mxu0
      %362 = vst.msk [vmem:[%s265] sm:$0xff] %vm280, %v354
      %363 = vst.msk [vmem:[%s265 + $0x8] sm:$0xff] %vm280, %v359
      %s364 = smul.u32 2, %s21
      %p365 = scmp.lt.s32.totalorder %s19, 2
      %s366 = scalar_select %p365, %s19, 2
      %p367 = scmp.lt.s32.totalorder %s364, 1
      %s368 = scalar_select %p367, %s364, 1
      %p369 = scmp.lt.s32.totalorder %s20, 0
      %s370 = scalar_select %p369, %s20, 0
      %s371 = sadd.s32 %s370, %s368
      %s372 = smul.addr %s366, 2
      %s373 = sadd.s32 %s371, %s372
      %s374 = smul.addr %s373, 8
      %s375 = scalar_lea.vmem %s3, %s374
      // Predicated region
      $region33: #{mha_forward.3} parent=31 // pred_check
        %p376 = pneg %p137
      $region34: #{mha_forward.3} parent=31 // pred_check_branch
        %378 = sbr.rel (%p376) target = $region36
      $region35: #{mha_forward.3} parent=31 // pred_region
        %s379 = smul.u32 2, %s21
      $region36: #{mha_forward.3} parent=31 // pred_fallthru
        _
    $region32: #{mha_forward.3} parent=5 // pred_fallthru
      _
    %p380 = scmp.le.s32.totalorder 2, %s9
    // Predicated region
    $region37: #{mha_forward.3} parent=5 // pred_check
      %p381 = pneg %p380
    $region38: #{mha_forward.3} parent=5 // pred_check_branch
      %383 = sbr.rel (%p381) target = $region40
    $region39: #{mha_forward.3} parent=5 // pred_region
      %s384 = ssub.s32 %s9, 2
      // Predicated region
      $region41: #{mha_forward.3} parent=39 // pred_check
        %p385 = pneg %p143
      $region42: #{mha_forward.3} parent=39 // pred_check_branch
        %387 = sbr.rel (%p385) target = $region44
      $region43: #{mha_forward.3} parent=39 // pred_region
        %s388 = smul.u32 2, %s24
        %p389 = scmp.lt.s32.totalorder %s22, 2
        %s390 = scalar_select %p389, %s22, 2
        %p391 = scmp.lt.s32.totalorder %s388, 1
        %s392 = scalar_select %p391, %s388, 1
        %p393 = scmp.lt.s32.totalorder %s23, 0
        %s394 = scalar_select %p393, %s23, 0
        %s395 = sadd.s32 %s394, %s392
        %s396 = smul.addr %s390, 2
        %s397 = sadd.s32 %s395, %s396
        %s398 = smul.addr %s397, 8
        %s399 = scalar_lea.vmem %s3, %s398
      $region44: #{mha_forward.3} parent=39 // pred_fallthru
        _
    $region40: #{mha_forward.3} parent=5 // pred_fallthru
      _
  $region6: #{mha_forward.3} parent=0 // loop_footer
    %s13 = sadd.s32 1, %s9
  $region7: #{mha_forward.3} parent=0 // loop_footer_branch
    %8 = sbr.rel target = $region3
  $region8: #{mha_forward.3} parent=0 // loop_exit
    _

// kernel: mha_forward.4
$region0: #{mha_forward.4}
  #allocation0 [shape = 'u32[]', space=smem, size = 0x4, offset = 0x4, fixed_abs, tag = 'smem constant byte address 0x4 - core index']
  #allocation1 [shape = 'u32[144,128]{1,0:T(1,128)}', space=vmem, size = 0x12000, scoped, tag = 'internal scratch']
  %s0 = inlined_call_operand.vmem [shape: f32[3,2,8,32], index: 0, kind: input, shape index: {}, may-alias: {0,1,2}]
  %s1 = inlined_call_operand.vmem [shape: f32[3,2,8,32], index: 1, kind: input, shape index: {}, may-alias: {0,1,2}]
  %s2 = inlined_call_operand.vmem [shape: f32[3,2,8,32], index: 2, kind: input, shape index: {}, may-alias: {0,1,2}]
  %s3 = inlined_call_operand.vmem [shape: f32[2,8,32], index: 3, kind: output, shape index: {}]
  %s4 = sld [smem:[#allocation0]]
  $region45: #{mha_forward.4} parent=0
    _
  %s6 = ssub.s32 1, %s4
  %s7 = scalar_select 0, %s6, %s4
  loop: start=0, step=1, limit=4
  $region2: #{mha_forward.4} parent=0 // loop_pre_header
    _
  $region3: #{mha_forward.4} parent=0 // loop_header
    %s9 = sphi 0, %s13
    %p10 = scmp.ge.s32.totalorder %s9, 4
    %s16 = sphi 0, %s28
    %s17 = sphi 0, %s24
    %s18 = sphi 0, %s16
    %s19 = sphi 0, %s17
    %s20 = sphi 0, %s18
    %s21 = sphi 0, %s19
    %s33 = sphi 0, %s35
    %s36 = sphi 0, %s33
    %s37 = sphi 0, %s36
    %s53 = sphi 0, %s37
    %s59 = sphi 0, %s61
    %s62 = sphi 0, %s59
    %s63 = sphi 0, %s62
    %s79 = sphi 0, %s63
    %s85 = sphi 0, %s87
    %s88 = sphi 0, %s85
    %s89 = sphi 0, %s88
    %s105 = sphi 0, %s89
    %s113 = sphi 0, %s115
    %s116 = sphi 0, %s113
    %s117 = sphi 0, %s116
    %s133 = sphi 0, %s117
  $region4: #{mha_forward.4} parent=0 // loop_header_branch
    %12 = sbr.rel (%p10) target = $region8
  $region5: #{mha_forward.4} parent=0 // loop_body
    %s14 = ssub.s32 %s9, 1
    %s15 = ssub.s32 %s9, 2
    %s22 = sadd.s32 1, %s17
    %p23 = scmp.ge.s32.totalorder %s22, 1
    %s24 = scalar_select %p23, 0, %s22
    %s25 = sadd.s32 1, %s16
    %s26 = scalar_select %p23, %s25, %s16
    %p27 = scmp.ge.s32.totalorder %s26, 2
    %s28 = scalar_select %p27, 0, %s26
    %s29 = ssub.s32 %s16, %s28
    %s30 = ssub.s32 %s17, %s24
    %s31 = sor.u32 %s29, %s30
    %p32 = scmp.eq.s32.totalorder %s31, 0
    %s34 = sadd.s32 %s33, 1
    %s35 = scalar_select %p32, %s33, %s34
    %p38 = pneg %p32
    %p39 = scmp.eq.s32.totalorder %s9, 1
    %p40 = por %p38, %p39
    %p41 = scmp.ne.s32.totalorder %s33, %s36
    %p42 = scmp.eq.s32.totalorder %s9, 0
    %p43 = por %p41, %p42
    %p44 = scmp.ne.s32.totalorder %s33, %s36
    %p45 = scmp.eq.s32.totalorder %s14, 1
    %p46 = por %p44, %p45
    %p47 = scmp.ne.s32.totalorder %s36, %s37
    %p48 = scmp.eq.s32.totalorder %s14, 0
    %p49 = por %p47, %p48
    %p50 = scmp.ne.s32.totalorder %s36, %s37
    %p51 = scmp.eq.s32.totalorder %s15, 1
    %p52 = por %p50, %p51
    %p54 = scmp.ne.s32.totalorder %s37, %s53
    %p55 = scmp.eq.s32.totalorder %s15, 0
    %p56 = por %p54, %p55
    %s57 = ssub.s32 %s16, %s28
    %p58 = scmp.eq.s32.totalorder %s57, 0
    %s60 = sadd.s32 %s59, 1
    %s61 = scalar_select %p58, %s59, %s60
    %p64 = pneg %p58
    %p65 = scmp.eq.s32.totalorder %s9, 1
    %p66 = por %p64, %p65
    %p67 = scmp.ne.s32.totalorder %s59, %s62
    %p68 = scmp.eq.s32.totalorder %s9, 0
    %p69 = por %p67, %p68
    %p70 = scmp.ne.s32.totalorder %s59, %s62
    %p71 = scmp.eq.s32.totalorder %s14, 1
    %p72 = por %p70, %p71
    %p73 = scmp.ne.s32.totalorder %s62, %s63
    %p74 = scmp.eq.s32.totalorder %s14, 0
    %p75 = por %p73, %p74
    %p76 = scmp.ne.s32.totalorder %s62, %s63
    %p77 = scmp.eq.s32.totalorder %s15, 1
    %p78 = por %p76, %p77
    %p80 = scmp.ne.s32.totalorder %s63, %s79
    %p81 = scmp.eq.s32.totalorder %s15, 0
    %p82 = por %p80, %p81
    %s83 = ssub.s32 %s16, %s28
    %p84 = scmp.eq.s32.totalorder %s83, 0
    %s86 = sadd.s32 %s85, 1
    %s87 = scalar_select %p84, %s85, %s86
    %p90 = pneg %p84
    %p91 = scmp.eq.s32.totalorder %s9, 1
    %p92 = por %p90, %p91
    %p93 = scmp.ne.s32.totalorder %s85, %s88
    %p94 = scmp.eq.s32.totalorder %s9, 0
    %p95 = por %p93, %p94
    %p96 = scmp.ne.s32.totalorder %s85, %s88
    %p97 = scmp.eq.s32.totalorder %s14, 1
    %p98 = por %p96, %p97
    %p99 = scmp.ne.s32.totalorder %s88, %s89
    %p100 = scmp.eq.s32.totalorder %s14, 0
    %p101 = por %p99, %p100
    %p102 = scmp.ne.s32.totalorder %s88, %s89
    %p103 = scmp.eq.s32.totalorder %s15, 1
    %p104 = por %p102, %p103
    %p106 = scmp.ne.s32.totalorder %s89, %s105
    %p107 = scmp.eq.s32.totalorder %s15, 0
    %p108 = por %p106, %p107
    %s109 = ssub.s32 %s16, %s28
    %s110 = ssub.s32 %s17, %s24
    %s111 = sor.u32 %s109, %s110
    %p112 = scmp.eq.s32.totalorder %s111, 0
    %s114 = sadd.s32 %s113, 1
    %s115 = scalar_select %p112, %s113, %s114
    %p118 = pneg %p112
    %p119 = scmp.eq.s32.totalorder %s9, 1
    %p120 = por %p118, %p119
    %p121 = scmp.ne.s32.totalorder %s113, %s116
    %p122 = scmp.eq.s32.totalorder %s9, 0
    %p123 = por %p121, %p122
    %p124 = scmp.ne.s32.totalorder %s113, %s116
    %p125 = scmp.eq.s32.totalorder %s14, 1
    %p126 = por %p124, %p125
    %p127 = scmp.ne.s32.totalorder %s116, %s117
    %p128 = scmp.eq.s32.totalorder %s14, 0
    %p129 = por %p127, %p128
    %p130 = scmp.ne.s32.totalorder %s116, %s117
    %p131 = scmp.eq.s32.totalorder %s15, 1
    %p132 = por %p130, %p131
    %p134 = scmp.ne.s32.totalorder %s117, %s133
    %p135 = scmp.eq.s32.totalorder %s15, 0
    %p136 = por %p134, %p135
    %p137 = scmp.le.s32.totalorder 1, %s9
    %p138 = scmp.lt.s32.totalorder %s9, 3
    %p139 = pnand %p137, %p138
    %p140 = pneg %p139
    // Predicated region
    $region9: #{mha_forward.4} parent=5 // pred_check
      _
    $region10: #{mha_forward.4} parent=5 // pred_check_branch
      %142 = sbr.rel (%p139) target = $region12
    $region11: #{mha_forward.4} parent=5 // pred_region
      %s143 = ssub.s32 %s9, 1
    $region12: #{mha_forward.4} parent=5 // pred_fallthru
      _
    %p144 = scmp.lt.s32.totalorder %s9, 2
    // Predicated region
    $region13: #{mha_forward.4} parent=5 // pred_check
      %p145 = pneg %p144
    $region14: #{mha_forward.4} parent=5 // pred_check_branch
      %147 = sbr.rel (%p145) target = $region16
    $region15: #{mha_forward.4} parent=5 // pred_region
      // Predicated region
      $region17: #{mha_forward.4} parent=15 // pred_check
        %p148 = pneg %p43
      $region18: #{mha_forward.4} parent=15 // pred_check_branch
        %150 = sbr.rel (%p148) target = $region20
      $region19: #{mha_forward.4} parent=15 // pred_region
        %p151 = scmp.lt.s32.totalorder %s16, 1
        %s152 = scalar_select %p151, %s16, 1
        %p153 = scmp.lt.s32.totalorder %s17, 0
        %s154 = scalar_select %p153, %s17, 0
        %s155 = sadd.s32 %s154, %s152
        %s156 = smul.addr %s155, 8
        %s157 = scalar_lea.vmem %s0, %s156
      $region20: #{mha_forward.4} parent=15 // pred_fallthru
        _
      // Predicated region
      $region21: #{mha_forward.4} parent=15 // pred_check
        %p158 = pneg %p69
      $region22: #{mha_forward.4} parent=15 // pred_check_branch
        %160 = sbr.rel (%p158) target = $region24
      $region23: #{mha_forward.4} parent=15 // pred_region
        %p161 = scmp.lt.s32.totalorder %s16, 1
        %s162 = scalar_select %p161, %s16, 1
        %s163 = sadd.s32 %s162, 2
        %s164 = smul.addr %s163, 8
        %s165 = scalar_lea.vmem %s1, %s164
      $region24: #{mha_forward.4} parent=15 // pred_fallthru
        _
      // Predicated region
      $region25: #{mha_forward.4} parent=15 // pred_check
        %p166 = pneg %p95
      $region26: #{mha_forward.4} parent=15 // pred_check_branch
        %168 = sbr.rel (%p166) target = $region28
      $region27: #{mha_forward.4} parent=15 // pred_region
        %p169 = scmp.lt.s32.totalorder %s16, 1
        %s170 = scalar_select %p169, %s16, 1
        %s171 = sadd.s32 %s170, 4
        %s172 = smul.addr %s171, 8
        %s173 = scalar_lea.vmem %s2, %s172
      $region28: #{mha_forward.4} parent=15 // pred_fallthru
        _
    $region16: #{mha_forward.4} parent=5 // pred_fallthru
      _
    %p174 = scmp.le.s32.totalorder 1, %s9
    %p175 = scmp.lt.s32.totalorder %s9, 3
    %p176 = pnand %p174, %p175
    %p177 = pneg %p176
    // Predicated region
    $region29: #{mha_forward.4} parent=5 // pred_check
      _
    $region30: #{mha_forward.4} parent=5 // pred_check_branch
      %179 = sbr.rel (%p176) target = $region32
    $region31: #{mha_forward.4} parent=5 // pred_region
      %s180 = ssub.s32 %s9, 1
      %p181 = scmp.lt.s32.totalorder %s18, 1
      %s182 = scalar_select %p181, %s18, 1
      %p183 = scmp.lt.s32.totalorder %s19, 0
      %s184 = scalar_select %p183, %s19, 0
      %s185 = sadd.s32 %s184, %s182
      %s186 = smul.addr %s185, 8
      %s187 = scalar_lea.vmem %s0, %s186
      %p188 = pneg %p49
      %p189 = pneg %p46
      %p190 = scmp.lt.s32.totalorder %s18, 1
      %s191 = scalar_select %p190, %s18, 1
      %s192 = sadd.s32 %s191, 2
      %s193 = smul.addr %s192, 8
      %s194 = scalar_lea.vmem %s1, %s193
      %p195 = pneg %p75
      %p196 = pneg %p72
      %p197 = scmp.lt.s32.totalorder %s18, 1
      %s198 = scalar_select %p197, %s18, 1
      %s199 = sadd.s32 %s198, 4
      %s200 = smul.addr %s199, 8
      %s201 = scalar_lea.vmem %s2, %s200
      %p202 = pneg %p101
      %p203 = pneg %p98
      %p204 = pneg %p129
      %p205 = pneg %p126
      %p206 = scmp.lt.s32.totalorder %s18, 1
      %s207 = scalar_select %p206, %s18, 1
      %p208 = scmp.lt.s32.totalorder %s19, 0
      %s209 = scalar_select %p208, %s19, 0
      %s210 = sadd.s32 %s209, %s207
      %s211 = smul.addr %s210, 8
      %s212 = scalar_lea.vmem %s3, %s211
      %p213 = scmp.lt.s32.totalorder %s18, 1
      %s214 = scalar_select %p213, %s18, 1
      %p215 = scmp.lt.s32.totalorder %s19, 0
      %s216 = scalar_select %p215, %s19, 0
      %s217 = sadd.s32 %s216, %s214
      %s218 = smul.addr %s217, 8
      %s219 = scalar_lea.vmem %s0, %s218
      %p220 = scmp.lt.s32.totalorder %s18, 1
      %s221 = scalar_select %p220, %s18, 1
      %s222 = sadd.s32 %s221, 2
      %s223 = smul.addr %s222, 8
      %s224 = scalar_lea.vmem %s1, %s223
      %p225 = scmp.lt.s32.totalorder %s18, 1
      %s226 = scalar_select %p225, %s18, 1
      %s227 = sadd.s32 %s226, 4
      %s228 = smul.addr %s227, 8
      %s229 = scalar_lea.vmem %s2, %s228
      %p230 = scmp.lt.s32.totalorder %s18, 1
      %s231 = scalar_select %p230, %s18, 1
      %p232 = scmp.lt.s32.totalorder %s19, 0
      %s233 = scalar_select %p232, %s19, 0
      %s234 = sadd.s32 %s233, %s231
      %s235 = smul.addr %s234, 8
      %s236 = scalar_lea.vmem %s3, %s235
      %v237 = vld [vmem:[%s219] sm:$0xff]
      %v238 = vld [vmem:[%s224] sm:$0xff]
      %v239 = vld [vmem:[%s229] sm:$0xff]
      %vm240 = vcmask 64512
      %v242 = vsel %vm240, %v237, 0
      %v245 = vsel %vm240, %v238, 0
      %247 = vmatprep.subr.mxu0 0.0
      %248 = vmatpush1.xpose.msra.mxu0 %v245
      %249 = vmatprep.subr.mxu0 0.0
      %250 = vmatpush1.xpose.msra.mxu0 0.0
      %251 = vmatprep.subr.mxu0 0.0
      %252 = vmatpush1.xpose.msra.mxu0 0.0
      %253 = vmatprep.subr.mxu0 0.0
      %254 = vmatpush1.xpose.msra.mxu0 0.0
      %255 = vmatprep.subr.mxu0 0.0
      %256 = vmatpush1.xpose.msra.mxu0 0.0
      %257 = vmatprep.subr.mxu0 0.0
      %258 = vmatpush1.xpose.msra.mxu0 0.0
      %259 = vmatprep.subr.mxu0 0.0
      %260 = vmatpush1.xpose.msra.mxu0 0.0
      %261 = vmatprep.subr.mxu0 0.0
      %262 = vmatpush1.xpose.msra.mxu0 0.0
      %263 = vmatprep.subr.mxu0 0.0
      %264 = vmatpush1.xpose.msra.mxu0 0.0
      %265 = vmatprep.subr.mxu0 0.0
      %266 = vmatpush1.xpose.msra.mxu0 0.0
      %267 = vmatprep.subr.mxu0 0.0
      %268 = vmatpush1.xpose.msra.mxu0 0.0
      %269 = vmatprep.subr.mxu0 0.0
      %270 = vmatpush1.xpose.msra.mxu0 0.0
      %271 = vmatprep.subr.mxu0 0.0
      %272 = vmatpush1.xpose.msra.mxu0 0.0
      %273 = vmatprep.subr.mxu0 0.0
      %274 = vmatpush1.xpose.msra.mxu0 0.0
      %275 = vmatprep.subr.mxu0 0.0
      %276 = vmatpush1.xpose.msra.mxu0 0.0
      %277 = vmatprep.subr.mxu0 0.0
      %278 = vmatpush1.xpose.msra.mxu0 0.0
      %279 = vmatprep.subr.mxu0 0.0
      %280 = vmatpush1.xpose.msra.mxu0 0.0
      %281 = vmatprep.subr.mxu0 0.0
      %282 = vmatpush1.xpose.msra.mxu0 0.0
      %283 = vmatprep.subr.mxu0 0.0
      %284 = vmatpush1.xpose.msra.mxu0 0.0
      %285 = vmatprep.subr.mxu0 0.0
      %286 = vmatpush1.xpose.msra.mxu0 0.0
      %287 = vmatprep.subr.mxu0 0.0
      %288 = vmatpush1.xpose.msra.mxu0 0.0
      %289 = vmatprep.subr.mxu0 0.0
      %290 = vmatpush1.xpose.msra.mxu0 0.0
      %291 = vmatprep.subr.mxu0 0.0
      %292 = vmatpush1.xpose.msra.mxu0 0.0
      %293 = vmatprep.subr.mxu0 0.0
      %294 = vmatpush1.xpose.msra.mxu0 0.0
      %295 = vmatprep.subr.mxu0 0.0
      %296 = vmatpush1.xpose.msra.mxu0 0.0
      %297 = vmatprep.subr.mxu0 0.0
      %298 = vmatpush1.xpose.msra.mxu0 0.0
      %299 = vmatprep.subr.mxu0 0.0
      %300 = vmatpush1.xpose.msra.mxu0 0.0
      %301 = vmatprep.subr.mxu0 0.0
      %302 = vmatpush1.xpose.msra.mxu0 0.0
      %303 = vmatprep.subr.mxu0 0.0
      %304 = vmatpush1.xpose.msra.mxu0 0.0
      %305 = vmatprep.subr.mxu0 0.0
      %306 = vmatpush1.xpose.msra.mxu0 0.0
      %307 = vmatprep.subr.mxu0 0.0
      %308 = vmatpush1.xpose.msra.mxu0 0.0
      %309 = vmatprep.subr.mxu0 0.0
      %310 = vmatpush1.xpose.msra.mxu0 0.0
      %311 = vmatprep.mubr.f32.mxu0 0.0
      %312 = vmatmul.mubr.f32.gmra.mrb[0].mxu0 %v242
      %v313 = vpop.f32.mrb[0].mxu0
      %v314 = vadd.f32 0.0, %v313
      %v315 = vpop.f32.mrb[0].mxu0
      %316 = vdwg.mxu0
      %v317 = vsel %vm240, %v314, -inf
      %318 = vmax.xlane.f32.xlu0 %v317
      %v319 = vpop.xlane.xlu0 %318
      %v320 = vsub.f32 %v314, %v319
      %v321 = vmul.f32 %v320, 1.442695
      %v322 = vpow.pop %v321
      %v323 = vsel %vm240, %v322, 0.0
      %324 = vadd.xlane.f32.xlu0 %v323
      %v325 = vpop.xlane.xlu0 %324
      %v327 = vsel %vm240, %v322, 0
      %329 = vmatprep.subr.mxu0 0.0
      %330 = vmatpush1.msra.mxu0 %v239
      %331 = vmatprep.subr.mxu0 0.0
      %332 = vmatpush1.msra.mxu0 0.0
      %333 = vmatprep.subr.mxu0 0.0
      %334 = vmatpush1.msra.mxu0 0.0
      %335 = vmatprep.subr.mxu0 0.0
      %336 = vmatpush1.msra.mxu0 0.0
      %337 = vmatprep.subr.mxu0 0.0
      %338 = vmatpush1.msra.mxu0 0.0
      %339 = vmatprep.subr.mxu0 0.0
      %340 = vmatpush1.msra.mxu0 0.0
      %341 = vmatprep.subr.mxu0 0.0
      %342 = vmatpush1.msra.mxu0 0.0
      %343 = vmatprep.subr.mxu0 0.0
      %344 = vmatpush1.msra.mxu0 0.0
      %345 = vmatprep.subr.mxu0 0.0
      %346 = vmatpush1.msra.mxu0 0.0
      %347 = vmatprep.subr.mxu0 0.0
      %348 = vmatpush1.msra.mxu0 0.0
      %349 = vmatprep.subr.mxu0 0.0
      %350 = vmatpush1.msra.mxu0 0.0
      %351 = vmatprep.subr.mxu0 0.0
      %352 = vmatpush1.msra.mxu0 0.0
      %353 = vmatprep.subr.mxu0 0.0
      %354 = vmatpush1.msra.mxu0 0.0
      %355 = vmatprep.subr.mxu0 0.0
      %356 = vmatpush1.msra.mxu0 0.0
      %357 = vmatprep.subr.mxu0 0.0
      %358 = vmatpush1.msra.mxu0 0.0
      %359 = vmatprep.subr.mxu0 0.0
      %360 = vmatpush1.msra.mxu0 0.0
      %361 = vmatprep.subr.mxu0 0.0
      %362 = vmatpush1.msra.mxu0 0.0
      %363 = vmatprep.subr.mxu0 0.0
      %364 = vmatpush1.msra.mxu0 0.0
      %365 = vmatprep.subr.mxu0 0.0
      %366 = vmatpush1.msra.mxu0 0.0
      %367 = vmatprep.subr.mxu0 0.0
      %368 = vmatpush1.msra.mxu0 0.0
      %369 = vmatprep.subr.mxu0 0.0
      %370 = vmatpush1.msra.mxu0 0.0
      %371 = vmatprep.subr.mxu0 0.0
      %372 = vmatpush1.msra.mxu0 0.0
      %373 = vmatprep.subr.mxu0 0.0
      %374 = vmatpush1.msra.mxu0 0.0
      %375 = vmatprep.subr.mxu0 0.0
      %376 = vmatpush1.msra.mxu0 0.0
      %377 = vmatprep.subr.mxu0 0.0
      %378 = vmatpush1.msra.mxu0 0.0
      %379 = vmatprep.subr.mxu0 0.0
      %380 = vmatpush1.msra.mxu0 0.0
      %381 = vmatprep.subr.mxu0 0.0
      %382 = vmatpush1.msra.mxu0 0.0
      %383 = vmatprep.subr.mxu0 0.0
      %384 = vmatpush1.msra.mxu0 0.0
      %385 = vmatprep.subr.mxu0 0.0
      %386 = vmatpush1.msra.mxu0 0.0
      %387 = vmatprep.subr.mxu0 0.0
      %388 = vmatpush1.msra.mxu0 0.0
      %389 = vmatprep.subr.mxu0 0.0
      %390 = vmatpush1.msra.mxu0 0.0
      %391 = vmatprep.subr.mxu0 0.0
      %392 = vmatpush1.msra.mxu0 0.0
      %393 = vmatprep.mubr.f32.mxu0 0.0
      %394 = vmatmul.mubr.f32.gmra.mrb[0].mxu0 %v327
      %v395 = vpop.f32.mrb[0].mxu0
      %v396 = vadd.f32 0.0, %v395
      %v397 = vpop.f32.mrb[0].mxu0
      %398 = vdwg.mxu0
      %v399 = vrcp.pop %v325
      %v400 = vmul.f32 %v396, %v399
      %401 = vst.msk [vmem:[%s236] sm:$0xff] %vm240, %v400
      %v402 = vld [vmem:[%s219] sm:$0xff]
      %v403 = vld [vmem:[%s224] sm:$0xff]
      %v404 = vld [vmem:[%s229] sm:$0xff]
      %406 = vrot.lane.b32.xlu0 %v402, 120
      %v407 = vpop.permute.xlu0 %406
      %409 = vrot.lane.b32.xlu0 %v403, 120
      %v410 = vpop.permute.xlu0 %409
      %v411 = vsel %vm240, %v407, 0
      %v413 = vsel %vm240, %v410, 0
      %415 = vmatprep.subr.mxu0 0.0
      %416 = vmatpush1.xpose.msra.mxu0 %v413
      %417 = vmatprep.subr.mxu0 0.0
      %418 = vmatpush1.xpose.msra.mxu0 0.0
      %419 = vmatprep.subr.mxu0 0.0
      %420 = vmatpush1.xpose.msra.mxu0 0.0
      %421 = vmatprep.subr.mxu0 0.0
      %422 = vmatpush1.xpose.msra.mxu0 0.0
      %423 = vmatprep.subr.mxu0 0.0
      %424 = vmatpush1.xpose.msra.mxu0 0.0
      %425 = vmatprep.subr.mxu0 0.0
      %426 = vmatpush1.xpose.msra.mxu0 0.0
      %427 = vmatprep.subr.mxu0 0.0
      %428 = vmatpush1.xpose.msra.mxu0 0.0
      %429 = vmatprep.subr.mxu0 0.0
      %430 = vmatpush1.xpose.msra.mxu0 0.0
      %431 = vmatprep.subr.mxu0 0.0
      %432 = vmatpush1.xpose.msra.mxu0 0.0
      %433 = vmatprep.subr.mxu0 0.0
      %434 = vmatpush1.xpose.msra.mxu0 0.0
      %435 = vmatprep.subr.mxu0 0.0
      %436 = vmatpush1.xpose.msra.mxu0 0.0
      %437 = vmatprep.subr.mxu0 0.0
      %438 = vmatpush1.xpose.msra.mxu0 0.0
      %439 = vmatprep.subr.mxu0 0.0
      %440 = vmatpush1.xpose.msra.mxu0 0.0
      %441 = vmatprep.subr.mxu0 0.0
      %442 = vmatpush1.xpose.msra.mxu0 0.0
      %443 = vmatprep.subr.mxu0 0.0
      %444 = vmatpush1.xpose.msra.mxu0 0.0
      %445 = vmatprep.subr.mxu0 0.0
      %446 = vmatpush1.xpose.msra.mxu0 0.0
      %447 = vmatprep.subr.mxu0 0.0
      %448 = vmatpush1.xpose.msra.mxu0 0.0
      %449 = vmatprep.subr.mxu0 0.0
      %450 = vmatpush1.xpose.msra.mxu0 0.0
      %451 = vmatprep.subr.mxu0 0.0
      %452 = vmatpush1.xpose.msra.mxu0 0.0
      %453 = vmatprep.subr.mxu0 0.0
      %454 = vmatpush1.xpose.msra.mxu0 0.0
      %455 = vmatprep.subr.mxu0 0.0
      %456 = vmatpush1.xpose.msra.mxu0 0.0
      %457 = vmatprep.subr.mxu0 0.0
      %458 = vmatpush1.xpose.msra.mxu0 0.0
      %459 = vmatprep.subr.mxu0 0.0
      %460 = vmatpush1.xpose.msra.mxu0 0.0
      %461 = vmatprep.subr.mxu0 0.0
      %462 = vmatpush1.xpose.msra.mxu0 0.0
      %463 = vmatprep.subr.mxu0 0.0
      %464 = vmatpush1.xpose.msra.mxu0 0.0
      %465 = vmatprep.subr.mxu0 0.0
      %466 = vmatpush1.xpose.msra.mxu0 0.0
      %467 = vmatprep.subr.mxu0 0.0
      %468 = vmatpush1.xpose.msra.mxu0 0.0
      %469 = vmatprep.subr.mxu0 0.0
      %470 = vmatpush1.xpose.msra.mxu0 0.0
      %471 = vmatprep.subr.mxu0 0.0
      %472 = vmatpush1.xpose.msra.mxu0 0.0
      %473 = vmatprep.subr.mxu0 0.0
      %474 = vmatpush1.xpose.msra.mxu0 0.0
      %475 = vmatprep.subr.mxu0 0.0
      %476 = vmatpush1.xpose.msra.mxu0 0.0
      %477 = vmatprep.subr.mxu0 0.0
      %478 = vmatpush1.xpose.msra.mxu0 0.0
      %479 = vmatprep.mubr.f32.mxu0 0.0
      %480 = vmatmul.mubr.f32.gmra.mrb[0].mxu0 %v411
      %v481 = vpop.f32.mrb[0].mxu0
      %v482 = vadd.f32 0.0, %v481
      %v483 = vpop.f32.mrb[0].mxu0
      %484 = vdwg.mxu0
      %v485 = vsel %vm240, %v482, -inf
      %486 = vmax.xlane.f32.xlu0 %v485
      %v487 = vpop.xlane.xlu0 %486
      %v488 = vsub.f32 %v482, %v487
      %v489 = vmul.f32 %v488, 1.442695
      %v490 = vpow.pop %v489
      %v491 = vsel %vm240, %v490, 0.0
      %492 = vadd.xlane.f32.xlu0 %v491
      %v493 = vpop.xlane.xlu0 %492
      %495 = vrot.lane.b32.xlu0 %v404, 120
      %v496 = vpop.permute.xlu0 %495
      %v499 = vsel %vm240, %v490, 0
      %501 = vmatprep.subr.mxu0 0.0
      %502 = vmatpush1.msra.mxu0 %v496
      %503 = vmatprep.subr.mxu0 0.0
      %504 = vmatpush1.msra.mxu0 0.0
      %505 = vmatprep.subr.mxu0 0.0
      %506 = vmatpush1.msra.mxu0 0.0
      %507 = vmatprep.subr.mxu0 0.0
      %508 = vmatpush1.msra.mxu0 0.0
      %509 = vmatprep.subr.mxu0 0.0
      %510 = vmatpush1.msra.mxu0 0.0
      %511 = vmatprep.subr.mxu0 0.0
      %512 = vmatpush1.msra.mxu0 0.0
      %513 = vmatprep.subr.mxu0 0.0
      %514 = vmatpush1.msra.mxu0 0.0
      %515 = vmatprep.subr.mxu0 0.0
      %516 = vmatpush1.msra.mxu0 0.0
      %517 = vmatprep.subr.mxu0 0.0
      %518 = vmatpush1.msra.mxu0 0.0
      %519 = vmatprep.subr.mxu0 0.0
      %520 = vmatpush1.msra.mxu0 0.0
      %521 = vmatprep.subr.mxu0 0.0
      %522 = vmatpush1.msra.mxu0 0.0
      %523 = vmatprep.subr.mxu0 0.0
      %524 = vmatpush1.msra.mxu0 0.0
      %525 = vmatprep.subr.mxu0 0.0
      %526 = vmatpush1.msra.mxu0 0.0
      %527 = vmatprep.subr.mxu0 0.0
      %528 = vmatpush1.msra.mxu0 0.0
      %529 = vmatprep.subr.mxu0 0.0
      %530 = vmatpush1.msra.mxu0 0.0
      %531 = vmatprep.subr.mxu0 0.0
      %532 = vmatpush1.msra.mxu0 0.0
      %533 = vmatprep.subr.mxu0 0.0
      %534 = vmatpush1.msra.mxu0 0.0
      %535 = vmatprep.subr.mxu0 0.0
      %536 = vmatpush1.msra.mxu0 0.0
      %537 = vmatprep.subr.mxu0 0.0
      %538 = vmatpush1.msra.mxu0 0.0
      %539 = vmatprep.subr.mxu0 0.0
      %540 = vmatpush1.msra.mxu0 0.0
      %541 = vmatprep.subr.mxu0 0.0
      %542 = vmatpush1.msra.mxu0 0.0
      %543 = vmatprep.subr.mxu0 0.0
      %544 = vmatpush1.msra.mxu0 0.0
      %545 = vmatprep.subr.mxu0 0.0
      %546 = vmatpush1.msra.mxu0 0.0
      %547 = vmatprep.subr.mxu0 0.0
      %548 = vmatpush1.msra.mxu0 0.0
      %549 = vmatprep.subr.mxu0 0.0
      %550 = vmatpush1.msra.mxu0 0.0
      %551 = vmatprep.subr.mxu0 0.0
      %552 = vmatpush1.msra.mxu0 0.0
      %553 = vmatprep.subr.mxu0 0.0
      %554 = vmatpush1.msra.mxu0 0.0
      %555 = vmatprep.subr.mxu0 0.0
      %556 = vmatpush1.msra.mxu0 0.0
      %557 = vmatprep.subr.mxu0 0.0
      %558 = vmatpush1.msra.mxu0 0.0
      %559 = vmatprep.subr.mxu0 0.0
      %560 = vmatpush1.msra.mxu0 0.0
      %561 = vmatprep.subr.mxu0 0.0
      %562 = vmatpush1.msra.mxu0 0.0
      %563 = vmatprep.subr.mxu0 0.0
      %564 = vmatpush1.msra.mxu0 0.0
      %565 = vmatprep.mubr.f32.mxu0 0.0
      %566 = vmatmul.mubr.f32.gmra.mrb[0].mxu0 %v499
      %v567 = vpop.f32.mrb[0].mxu0
      %v568 = vadd.f32 0.0, %v567
      %v569 = vpop.f32.mrb[0].mxu0
      %570 = vdwg.mxu0
      %v571 = vrcp.pop %v493
      %v572 = vmul.f32 %v568, %v571
      %574 = vrot.lane.b32.xlu0 %v572, 8
      %v575 = vpop.permute.xlu0 %574
      %vm577 = vcmask 130112
      %578 = vst.msk [vmem:[%s236] sm:$0xff] %vm577, %v575
      %v579 = vld [vmem:[%s219] sm:$0xff]
      %v580 = vld [vmem:[%s224] sm:$0xff]
      %v581 = vld [vmem:[%s229] sm:$0xff]
      %583 = vrot.lane.b32.xlu0 %v579, 112
      %v584 = vpop.permute.xlu0 %583
      %586 = vrot.lane.b32.xlu0 %v580, 112
      %v587 = vpop.permute.xlu0 %586
      %v588 = vsel %vm240, %v584, 0
      %v590 = vsel %vm240, %v587, 0
      %592 = vmatprep.subr.mxu0 0.0
      %593 = vmatpush1.xpose.msra.mxu0 %v590
      %594 = vmatprep.subr.mxu0 0.0
      %595 = vmatpush1.xpose.msra.mxu0 0.0
      %596 = vmatprep.subr.mxu0 0.0
      %597 = vmatpush1.xpose.msra.mxu0 0.0
      %598 = vmatprep.subr.mxu0 0.0
      %599 = vmatpush1.xpose.msra.mxu0 0.0
      %600 = vmatprep.subr.mxu0 0.0
      %601 = vmatpush1.xpose.msra.mxu0 0.0
      %602 = vmatprep.subr.mxu0 0.0
      %603 = vmatpush1.xpose.msra.mxu0 0.0
      %604 = vmatprep.subr.mxu0 0.0
      %605 = vmatpush1.xpose.msra.mxu0 0.0
      %606 = vmatprep.subr.mxu0 0.0
      %607 = vmatpush1.xpose.msra.mxu0 0.0
      %608 = vmatprep.subr.mxu0 0.0
      %609 = vmatpush1.xpose.msra.mxu0 0.0
      %610 = vmatprep.subr.mxu0 0.0
      %611 = vmatpush1.xpose.msra.mxu0 0.0
      %612 = vmatprep.subr.mxu0 0.0
      %613 = vmatpush1.xpose.msra.mxu0 0.0
      %614 = vmatprep.subr.mxu0 0.0
      %615 = vmatpush1.xpose.msra.mxu0 0.0
      %616 = vmatprep.subr.mxu0 0.0
      %617 = vmatpush1.xpose.msra.mxu0 0.0
      %618 = vmatprep.subr.mxu0 0.0
      %619 = vmatpush1.xpose.msra.mxu0 0.0
      %620 = vmatprep.subr.mxu0 0.0
      %621 = vmatpush1.xpose.msra.mxu0 0.0
      %622 = vmatprep.subr.mxu0 0.0
      %623 = vmatpush1.xpose.msra.mxu0 0.0
      %624 = vmatprep.subr.mxu0 0.0
      %625 = vmatpush1.xpose.msra.mxu0 0.0
      %626 = vmatprep.subr.mxu0 0.0
      %627 = vmatpush1.xpose.msra.mxu0 0.0
      %628 = vmatprep.subr.mxu0 0.0
      %629 = vmatpush1.xpose.msra.mxu0 0.0
      %630 = vmatprep.subr.mxu0 0.0
      %631 = vmatpush1.xpose.msra.mxu0 0.0
      %632 = vmatprep.subr.mxu0 0.0
      %633 = vmatpush1.xpose.msra.mxu0 0.0
      %634 = vmatprep.subr.mxu0 0.0
      %635 = vmatpush1.xpose.msra.mxu0 0.0
      %636 = vmatprep.subr.mxu0 0.0
      %637 = vmatpush1.xpose.msra.mxu0 0.0
      %638 = vmatprep.subr.mxu0 0.0
      %639 = vmatpush1.xpose.msra.mxu0 0.0
      %640 = vmatprep.subr.mxu0 0.0
      %641 = vmatpush1.xpose.msra.mxu0 0.0
      %642 = vmatprep.subr.mxu0 0.0
      %643 = vmatpush1.xpose.msra.mxu0 0.0
      %644 = vmatprep.subr.mxu0 0.0
      %645 = vmatpush1.xpose.msra.mxu0 0.0
      %646 = vmatprep.subr.mxu0 0.0
      %647 = vmatpush1.xpose.msra.mxu0 0.0
      %648 = vmatprep.subr.mxu0 0.0
      %649 = vmatpush1.xpose.msra.mxu0 0.0
      %650 = vmatprep.subr.mxu0 0.0
      %651 = vmatpush1.xpose.msra.mxu0 0.0
      %652 = vmatprep.subr.mxu0 0.0
      %653 = vmatpush1.xpose.msra.mxu0 0.0
      %654 = vmatprep.subr.mxu0 0.0
      %655 = vmatpush1.xpose.msra.mxu0 0.0
      %656 = vmatprep.mubr.f32.mxu0 0.0
      %657 = vmatmul.mubr.f32.gmra.mrb[0].mxu0 %v588
      %v658 = vpop.f32.mrb[0].mxu0
      %v659 = vadd.f32 0.0, %v658
      %v660 = vpop.f32.mrb[0].mxu0
      %661 = vdwg.mxu0
      %v662 = vsel %vm240, %v659, -inf
      %663 = vmax.xlane.f32.xlu0 %v662
      %v664 = vpop.xlane.xlu0 %663
      %v665 = vsub.f32 %v659, %v664
      %v666 = vmul.f32 %v665, 1.442695
      %v667 = vpow.pop %v666
      %v668 = vsel %vm240, %v667, 0.0
      %669 = vadd.xlane.f32.xlu0 %v668
      %v670 = vpop.xlane.xlu0 %669
      %672 = vrot.lane.b32.xlu0 %v581, 112
      %v673 = vpop.permute.xlu0 %672
      %v676 = vsel %vm240, %v667, 0
      %678 = vmatprep.subr.mxu0 0.0
      %679 = vmatpush1.msra.mxu0 %v673
      %680 = vmatprep.subr.mxu0 0.0
      %681 = vmatpush1.msra.mxu0 0.0
      %682 = vmatprep.subr.mxu0 0.0
      %683 = vmatpush1.msra.mxu0 0.0
      %684 = vmatprep.subr.mxu0 0.0
      %685 = vmatpush1.msra.mxu0 0.0
      %686 = vmatprep.subr.mxu0 0.0
      %687 = vmatpush1.msra.mxu0 0.0
      %688 = vmatprep.subr.mxu0 0.0
      %689 = vmatpush1.msra.mxu0 0.0
      %690 = vmatprep.subr.mxu0 0.0
      %691 = vmatpush1.msra.mxu0 0.0
      %692 = vmatprep.subr.mxu0 0.0
      %693 = vmatpush1.msra.mxu0 0.0
      %694 = vmatprep.subr.mxu0 0.0
      %695 = vmatpush1.msra.mxu0 0.0
      %696 = vmatprep.subr.mxu0 0.0
      %697 = vmatpush1.msra.mxu0 0.0
      %698 = vmatprep.subr.mxu0 0.0
      %699 = vmatpush1.msra.mxu0 0.0
      %700 = vmatprep.subr.mxu0 0.0
      %701 = vmatpush1.msra.mxu0 0.0
      %702 = vmatprep.subr.mxu0 0.0
      %703 = vmatpush1.msra.mxu0 0.0
      %704 = vmatprep.subr.mxu0 0.0
      %705 = vmatpush1.msra.mxu0 0.0
      %706 = vmatprep.subr.mxu0 0.0
      %707 = vmatpush1.msra.mxu0 0.0
      %708 = vmatprep.subr.mxu0 0.0
      %709 = vmatpush1.msra.mxu0 0.0
      %710 = vmatprep.subr.mxu0 0.0
      %711 = vmatpush1.msra.mxu0 0.0
      %712 = vmatprep.subr.mxu0 0.0
      %713 = vmatpush1.msra.mxu0 0.0
      %714 = vmatprep.subr.mxu0 0.0
      %715 = vmatpush1.msra.mxu0 0.0
      %716 = vmatprep.subr.mxu0 0.0
      %717 = vmatpush1.msra.mxu0 0.0
      %718 = vmatprep.subr.mxu0 0.0
      %719 = vmatpush1.msra.mxu0 0.0
      %720 = vmatprep.subr.mxu0 0.0
      %721 = vmatpush1.msra.mxu0 0.0
      %722 = vmatprep.subr.mxu0 0.0
      %723 = vmatpush1.msra.mxu0 0.0
      %724 = vmatprep.subr.mxu0 0.0
      %725 = vmatpush1.msra.mxu0 0.0
      %726 = vmatprep.subr.mxu0 0.0
      %727 = vmatpush1.msra.mxu0 0.0
      %728 = vmatprep.subr.mxu0 0.0
      %729 = vmatpush1.msra.mxu0 0.0
      %730 = vmatprep.subr.mxu0 0.0
      %731 = vmatpush1.msra.mxu0 0.0
      %732 = vmatprep.subr.mxu0 0.0
      %733 = vmatpush1.msra.mxu0 0.0
      %734 = vmatprep.subr.mxu0 0.0
      %735 = vmatpush1.msra.mxu0 0.0
      %736 = vmatprep.subr.mxu0 0.0
      %737 = vmatpush1.msra.mxu0 0.0
      %738 = vmatprep.subr.mxu0 0.0
      %739 = vmatpush1.msra.mxu0 0.0
      %740 = vmatprep.subr.mxu0 0.0
      %741 = vmatpush1.msra.mxu0 0.0
      %742 = vmatprep.mubr.f32.mxu0 0.0
      %743 = vmatmul.mubr.f32.gmra.mrb[0].mxu0 %v676
      %v744 = vpop.f32.mrb[0].mxu0
      %v745 = vadd.f32 0.0, %v744
      %v746 = vpop.f32.mrb[0].mxu0
      %747 = vdwg.mxu0
      %v748 = vrcp.pop %v670
      %v749 = vmul.f32 %v745, %v748
      %751 = vrot.lane.b32.xlu0 %v749, 16
      %v752 = vpop.permute.xlu0 %751
      %vm754 = vcmask 195712
      %755 = vst.msk [vmem:[%s236] sm:$0xff] %vm754, %v752
      %v756 = vld [vmem:[%s219] sm:$0xff]
      %v757 = vld [vmem:[%s224] sm:$0xff]
      %v758 = vld [vmem:[%s229] sm:$0xff]
      %760 = vrot.lane.b32.xlu0 %v756, 104
      %v761 = vpop.permute.xlu0 %760
      %763 = vrot.lane.b32.xlu0 %v757, 104
      %v764 = vpop.permute.xlu0 %763
      %v765 = vsel %vm240, %v761, 0
      %v767 = vsel %vm240, %v764, 0
      %769 = vmatprep.subr.mxu0 0.0
      %770 = vmatpush1.xpose.msra.mxu0 %v767
      %771 = vmatprep.subr.mxu0 0.0
      %772 = vmatpush1.xpose.msra.mxu0 0.0
      %773 = vmatprep.subr.mxu0 0.0
      %774 = vmatpush1.xpose.msra.mxu0 0.0
      %775 = vmatprep.subr.mxu0 0.0
      %776 = vmatpush1.xpose.msra.mxu0 0.0
      %777 = vmatprep.subr.mxu0 0.0
      %778 = vmatpush1.xpose.msra.mxu0 0.0
      %779 = vmatprep.subr.mxu0 0.0
      %780 = vmatpush1.xpose.msra.mxu0 0.0
      %781 = vmatprep.subr.mxu0 0.0
      %782 = vmatpush1.xpose.msra.mxu0 0.0
      %783 = vmatprep.subr.mxu0 0.0
      %784 = vmatpush1.xpose.msra.mxu0 0.0
      %785 = vmatprep.subr.mxu0 0.0
      %786 = vmatpush1.xpose.msra.mxu0 0.0
      %787 = vmatprep.subr.mxu0 0.0
      %788 = vmatpush1.xpose.msra.mxu0 0.0
      %789 = vmatprep.subr.mxu0 0.0
      %790 = vmatpush1.xpose.msra.mxu0 0.0
      %791 = vmatprep.subr.mxu0 0.0
      %792 = vmatpush1.xpose.msra.mxu0 0.0
      %793 = vmatprep.subr.mxu0 0.0
      %794 = vmatpush1.xpose.msra.mxu0 0.0
      %795 = vmatprep.subr.mxu0 0.0
      %796 = vmatpush1.xpose.msra.mxu0 0.0
      %797 = vmatprep.subr.mxu0 0.0
      %798 = vmatpush1.xpose.msra.mxu0 0.0
      %799 = vmatprep.subr.mxu0 0.0
      %800 = vmatpush1.xpose.msra.mxu0 0.0
      %801 = vmatprep.subr.mxu0 0.0
      %802 = vmatpush1.xpose.msra.mxu0 0.0
      %803 = vmatprep.subr.mxu0 0.0
      %804 = vmatpush1.xpose.msra.mxu0 0.0
      %805 = vmatprep.subr.mxu0 0.0
      %806 = vmatpush1.xpose.msra.mxu0 0.0
      %807 = vmatprep.subr.mxu0 0.0
      %808 = vmatpush1.xpose.msra.mxu0 0.0
      %809 = vmatprep.subr.mxu0 0.0
      %810 = vmatpush1.xpose.msra.mxu0 0.0
      %811 = vmatprep.subr.mxu0 0.0
      %812 = vmatpush1.xpose.msra.mxu0 0.0
      %813 = vmatprep.subr.mxu0 0.0
      %814 = vmatpush1.xpose.msra.mxu0 0.0
      %815 = vmatprep.subr.mxu0 0.0
      %816 = vmatpush1.xpose.msra.mxu0 0.0
      %817 = vmatprep.subr.mxu0 0.0
      %818 = vmatpush1.xpose.msra.mxu0 0.0
      %819 = vmatprep.subr.mxu0 0.0
      %820 = vmatpush1.xpose.msra.mxu0 0.0
      %821 = vmatprep.subr.mxu0 0.0
      %822 = vmatpush1.xpose.msra.mxu0 0.0
      %823 = vmatprep.subr.mxu0 0.0
      %824 = vmatpush1.xpose.msra.mxu0 0.0
      %825 = vmatprep.subr.mxu0 0.0
      %826 = vmatpush1.xpose.msra.mxu0 0.0
      %827 = vmatprep.subr.mxu0 0.0
      %828 = vmatpush1.xpose.msra.mxu0 0.0
      %829 = vmatprep.subr.mxu0 0.0
      %830 = vmatpush1.xpose.msra.mxu0 0.0
      %831 = vmatprep.subr.mxu0 0.0
      %832 = vmatpush1.xpose.msra.mxu0 0.0
      %833 = vmatprep.mubr.f32.mxu0 0.0
      %834 = vmatmul.mubr.f32.gmra.mrb[0].mxu0 %v765
      %v835 = vpop.f32.mrb[0].mxu0
      %v836 = vadd.f32 0.0, %v835
      %v837 = vpop.f32.mrb[0].mxu0
      %838 = vdwg.mxu0
      %v839 = vsel %vm240, %v836, -inf
      %840 = vmax.xlane.f32.xlu0 %v839
      %v841 = vpop.xlane.xlu0 %840
      %v842 = vsub.f32 %v836, %v841
      %v843 = vmul.f32 %v842, 1.442695
      %v844 = vpow.pop %v843
      %v845 = vsel %vm240, %v844, 0.0
      %846 = vadd.xlane.f32.xlu0 %v845
      %v847 = vpop.xlane.xlu0 %846
      %849 = vrot.lane.b32.xlu0 %v758, 104
      %v850 = vpop.permute.xlu0 %849
      %v853 = vsel %vm240, %v844, 0
      %855 = vmatprep.subr.mxu0 0.0
      %856 = vmatpush1.msra.mxu0 %v850
      %857 = vmatprep.subr.mxu0 0.0
      %858 = vmatpush1.msra.mxu0 0.0
      %859 = vmatprep.subr.mxu0 0.0
      %860 = vmatpush1.msra.mxu0 0.0
      %861 = vmatprep.subr.mxu0 0.0
      %862 = vmatpush1.msra.mxu0 0.0
      %863 = vmatprep.subr.mxu0 0.0
      %864 = vmatpush1.msra.mxu0 0.0
      %865 = vmatprep.subr.mxu0 0.0
      %866 = vmatpush1.msra.mxu0 0.0
      %867 = vmatprep.subr.mxu0 0.0
      %868 = vmatpush1.msra.mxu0 0.0
      %869 = vmatprep.subr.mxu0 0.0
      %870 = vmatpush1.msra.mxu0 0.0
      %871 = vmatprep.subr.mxu0 0.0
      %872 = vmatpush1.msra.mxu0 0.0
      %873 = vmatprep.subr.mxu0 0.0
      %874 = vmatpush1.msra.mxu0 0.0
      %875 = vmatprep.subr.mxu0 0.0
      %876 = vmatpush1.msra.mxu0 0.0
      %877 = vmatprep.subr.mxu0 0.0
      %878 = vmatpush1.msra.mxu0 0.0
      %879 = vmatprep.subr.mxu0 0.0
      %880 = vmatpush1.msra.mxu0 0.0
      %881 = vmatprep.subr.mxu0 0.0
      %882 = vmatpush1.msra.mxu0 0.0
      %883 = vmatprep.subr.mxu0 0.0
      %884 = vmatpush1.msra.mxu0 0.0
      %885 = vmatprep.subr.mxu0 0.0
      %886 = vmatpush1.msra.mxu0 0.0
      %887 = vmatprep.subr.mxu0 0.0
      %888 = vmatpush1.msra.mxu0 0.0
      %889 = vmatprep.subr.mxu0 0.0
      %890 = vmatpush1.msra.mxu0 0.0
      %891 = vmatprep.subr.mxu0 0.0
      %892 = vmatpush1.msra.mxu0 0.0
      %893 = vmatprep.subr.mxu0 0.0
      %894 = vmatpush1.msra.mxu0 0.0
      %895 = vmatprep.subr.mxu0 0.0
      %896 = vmatpush1.msra.mxu0 0.0
      %897 = vmatprep.subr.mxu0 0.0
      %898 = vmatpush1.msra.mxu0 0.0
      %899 = vmatprep.subr.mxu0 0.0
      %900 = vmatpush1.msra.mxu0 0.0
      %901 = vmatprep.subr.mxu0 0.0
      %902 = vmatpush1.msra.mxu0 0.0
      %903 = vmatprep.subr.mxu0 0.0
      %904 = vmatpush1.msra.mxu0 0.0
      %905 = vmatprep.subr.mxu0 0.0
      %906 = vmatpush1.msra.mxu0 0.0
      %907 = vmatprep.subr.mxu0 0.0
      %908 = vmatpush1.msra.mxu0 0.0
      %909 = vmatprep.subr.mxu0 0.0
      %910 = vmatpush1.msra.mxu0 0.0
      %911 = vmatprep.subr.mxu0 0.0
      %912 = vmatpush1.msra.mxu0 0.0
      %913 = vmatprep.subr.mxu0 0.0
      %914 = vmatpush1.msra.mxu0 0.0
      %915 = vmatprep.subr.mxu0 0.0
      %916 = vmatpush1.msra.mxu0 0.0
      %917 = vmatprep.subr.mxu0 0.0
      %918 = vmatpush1.msra.mxu0 0.0
      %919 = vmatprep.mubr.f32.mxu0 0.0
      %920 = vmatmul.mubr.f32.gmra.mrb[0].mxu0 %v853
      %v921 = vpop.f32.mrb[0].mxu0
      %v922 = vadd.f32 0.0, %v921
      %v923 = vpop.f32.mrb[0].mxu0
      %924 = vdwg.mxu0
      %v925 = vrcp.pop %v847
      %v926 = vmul.f32 %v922, %v925
      %928 = vrot.lane.b32.xlu0 %v926, 24
      %v929 = vpop.permute.xlu0 %928
      %vm931 = vcmask 261312
      %932 = vst.msk [vmem:[%s236] sm:$0xff] %vm931, %v929
      %p933 = scmp.lt.s32.totalorder %s18, 1
      %s934 = scalar_select %p933, %s18, 1
      %p935 = scmp.lt.s32.totalorder %s19, 0
      %s936 = scalar_select %p935, %s19, 0
      %s937 = sadd.s32 %s936, %s934
      %s938 = smul.addr %s937, 8
      %s939 = scalar_lea.vmem %s3, %s938
      // Predicated region
      $region33: #{mha_forward.4} parent=31 // pred_check
        %p940 = pneg %p126
      $region34: #{mha_forward.4} parent=31 // pred_check_branch
        %942 = sbr.rel (%p940) target = $region36
      $region35: #{mha_forward.4} parent=31 // pred_region
        _
      $region36: #{mha_forward.4} parent=31 // pred_fallthru
        _
    $region32: #{mha_forward.4} parent=5 // pred_fallthru
      _
    %p943 = scmp.le.s32.totalorder 2, %s9
    // Predicated region
    $region37: #{mha_forward.4} parent=5 // pred_check
      %p944 = pneg %p943
    $region38: #{mha_forward.4} parent=5 // pred_check_branch
      %946 = sbr.rel (%p944) target = $region40
    $region39: #{mha_forward.4} parent=5 // pred_region
      %s947 = ssub.s32 %s9, 2
      // Predicated region
      $region41: #{mha_forward.4} parent=39 // pred_check
        %p948 = pneg %p132
      $region42: #{mha_forward.4} parent=39 // pred_check_branch
        %950 = sbr.rel (%p948) target = $region44
      $region43: #{mha_forward.4} parent=39 // pred_region
        %p951 = scmp.lt.s32.totalorder %s20, 1
        %s952 = scalar_select %p951, %s20, 1
        %p953 = scmp.lt.s32.totalorder %s21, 0
        %s954 = scalar_select %p953, %s21, 0
        %s955 = sadd.s32 %s954, %s952
        %s956 = smul.addr %s955, 8
        %s957 = scalar_lea.vmem %s3, %s956
      $region44: #{mha_forward.4} parent=39 // pred_fallthru
        _
    $region40: #{mha_forward.4} parent=5 // pred_fallthru
      _
  $region6: #{mha_forward.4} parent=0 // loop_footer
    %s13 = sadd.s32 1, %s9
  $region7: #{mha_forward.4} parent=0 // loop_footer_branch
    %8 = sbr.rel target = $region3
  $region8: #{mha_forward.4} parent=0 // loop_exit
    _

</llo_original>
